<compile_context>
chip_gen: v5e
topology: v5e:2x2
jax: 0.10.0
libtpu: 0.0.40
codegen_flags: <defaults>
</compile_context>

<pallas_src>
import math
import numpy as np
import jax
import jax.numpy as jnp
from jax.experimental import pallas as pl
from jax.experimental.pallas import tpu as pltpu


# ----------------------------- Pallas kernel ---------------------------------
def lstm_classifier_kernel(emb_ref, mask_ref, wih_ref, bg_ref, whh_ref,
                           wh_ref, bh_ref, ws_ref, bs_ref, h0_ref, c0_ref,
                           out_ref, gx_ref):
    """Input projection + whole recurrence + classifier head for one batch block.

    emb_ref : (T, BB, E)  embeddings for this batch block
    mask_ref: (T, BB, 1)  f32 padding mask (1.0 where t < length)
    wih_ref : (E, 4H)     W_ih^T,  bg_ref: (1, 4H) folded b_ih + b_hh
    whh_ref : (H, 4H)     W_hh^T
    wh_ref/bh_ref : hiddenLayer,  ws_ref/bs_ref : softmaxLayer
    h0_ref/c0_ref : (BB, H) initial hidden/cell state
    gx_ref  : (T, BB, 4H) VMEM scratch for the pre-projected input gates
    """
    T, BB, E = emb_ref.shape
    H = whh_ref.shape[0]
    G = whh_ref.shape[1]                    # 4H (lane-dense, 128 at demo size)

    # --- time-parallel input projection (one big MXU matmul, biases folded) ---
    emb_flat = emb_ref[...].reshape(T * BB, E)
    gx_ref[...] = (jnp.dot(emb_flat, wih_ref[...],
                           preferred_element_type=jnp.float32)
                   + bg_ref[...]).reshape(T, BB, G)

    # --- hoisted loop invariants ---
    whh = whh_ref[...]                      # recurrent weight resident across all T steps
    lane = jax.lax.broadcasted_iota(jnp.int32, (BB, G), 1)
    is_g = (lane >= 2 * H) & (lane < 3 * H)  # g-gate lanes use tanh, i/f/o use sigmoid

    def step(t, carry):
        h, c = carry
        # PyTorch LSTM cell, gate order [i, f, g, o]; input projection precomputed.
        gates = gx_ref[t] + jnp.dot(h, whh, preferred_element_type=jnp.float32)  # (BB, 4H)
        act = jnp.where(is_g, jnp.tanh(gates), jax.nn.sigmoid(gates))            # 2 EUP passes
        i = act[:, 0 * H:1 * H]
        f = act[:, 1 * H:2 * H]
        g = act[:, 2 * H:3 * H]
        o = act[:, 3 * H:4 * H]

        c_new = f * c + i * g
        h_new = o * jnp.tanh(c_new)

        # packed-sequence semantics: padded steps do not advance the state
        m = mask_ref[t]                     # (BB, 1) f32, broadcasts over H
        return (h + m * (h_new - h), c + m * (c_new - c))

    hn, _ = jax.lax.fori_loop(0, T, step, (h0_ref[...], c0_ref[...]),
                              unroll=True if T <= 16 else 8)

    # hiddenLayer + Tanh, then softmaxLayer (logits)
    a = jnp.tanh(jnp.dot(hn, wh_ref[...],
                         preferred_element_type=jnp.float32) + bh_ref[...])
    out_ref[...] = (jnp.dot(a, ws_ref[...],
                            preferred_element_type=jnp.float32) + bs_ref[...])


# ------------------------------ wrapper ---------------------------------------
def text_classifier_forward(batch_input, lengths, h0, c0, params, *, batch_block=8):
    """batch_input: (T, B) int32 token ids (PyTorch passes (seq, batch) and transposes).
    lengths: (B,) int32.  h0/c0: (B, H) float32 (PyTorch hidden0 squeezed over layer dim)."""
    T, B = batch_input.shape
    E = params["embedding"].shape[1]
    H = h0.shape[1]
    C = params["ws_T"].shape[1]
    G = 4 * H

    # Glue (data-dependent gather stays in XLA): embedding lookup + padding mask.
    emb = params["embedding"][batch_input].astype(jnp.float32)          # (T, B, E)
    mask = (jnp.arange(T, dtype=jnp.int32)[:, None]
            < lengths.astype(jnp.int32)[None, :]).astype(jnp.float32)[:, :, None]  # (T, B, 1)
    bg = (params["bih"] + params["bhh"]).astype(jnp.float32)            # (1, 4H)

    BB = min(batch_block, B)
    assert B % BB == 0, "batch must be divisible by the batch block"
    nb = B // BB

    grid_spec = pltpu.PrefetchScalarGridSpec(
        num_scalar_prefetch=0,
        grid=(nb,),                                                 # batch-parallel axis
        in_specs=[
            pl.BlockSpec((T, BB, E), lambda b: (0, b, 0)),          # embeddings
            pl.BlockSpec((T, BB, 1), lambda b: (0, b, 0)),          # padding mask
            pl.BlockSpec((E, G), lambda b: (0, 0)),                 # W_ih^T
            pl.BlockSpec((1, G), lambda b: (0, 0)),                 # b_ih + b_hh
            pl.BlockSpec((H, G), lambda b: (0, 0)),                 # W_hh^T
            pl.BlockSpec((H, H), lambda b: (0, 0)),                 # hiddenLayer W^T
            pl.BlockSpec((1, H), lambda b: (0, 0)),                 # hiddenLayer b
            pl.BlockSpec((H, C), lambda b: (0, 0)),                 # softmaxLayer W^T
            pl.BlockSpec((1, C), lambda b: (0, 0)),                 # softmaxLayer b
            pl.BlockSpec((BB, H), lambda b: (b, 0)),                # h0
            pl.BlockSpec((BB, H), lambda b: (b, 0)),                # c0
        ],
        out_specs=pl.BlockSpec((BB, C), lambda b: (b, 0)),
        scratch_shapes=[pltpu.VMEM((T, BB, G), jnp.float32)],       # pre-projected gates
    )

    return pl.pallas_call(
        lstm_classifier_kernel,
        out_shape=jax.ShapeDtypeStruct((B, C), jnp.float32),
        grid_spec=grid_spec,
        compiler_params=pltpu.CompilerParams(dimension_semantics=("parallel",)),
    )(emb, mask, params["wih_T"], bg, params["whh_T"],
      params["wh_T"], params["bh"], params["ws_T"], params["bs"], h0, c0)


# --------------------------- pure-JAX reference --------------------------------
def reference_forward(batch_input, lengths, h0, c0, params):
    emb = params["embedding"][batch_input].astype(jnp.float32)    # (T, B, E)
    T = emb.shape[0]

    def step(carry, inp):
        h, c = carry
        x_t, t = inp
        gates = (x_t @ params["wih_T"] + h @ params["whh_T"]
                 + params["bih"] + params["bhh"])
        i, f, g, o = jnp.split(gates, 4, axis=-1)
        i, f, o = jax.nn.sigmoid(i), jax.nn.sigmoid(f), jax.nn.sigmoid(o)
        g = jnp.tanh(g)
        c_new = f * c + i * g
        h_new = o * jnp.tanh(c_new)
        mask = (t < lengths)[:, None]
        return (jnp.where(mask, h_new, h), jnp.where(mask, c_new, c)), None

    (hn, _), _ = jax.lax.scan(step, (h0, c0), (emb, jnp.arange(T)))
    a = jnp.tanh(hn @ params["wh_T"] + params["bh"])
    return a @ params["ws_T"] + params["bs"]


# ------------------------------- main ------------------------------------------
if __name__ == "__main__":
    # Small, sublane/lane-friendly sizes (4H = 128 -> lane-dense gate tensor).
    # B = 16 with batch_block = 8 exercises the batch-parallel grid axis (2 blocks).
    vocSize, embedDim, hiddenDim, classNum = 50, 32, 32, 8
    T, B = 8, 16
    H, E, C = hiddenDim, embedDim, classNum

    key = jax.random.PRNGKey(0)
    ks = jax.random.split(key, 8)

    initScale = math.sqrt(6.0) / math.sqrt(hiddenDim + (embedDim + hiddenDim))
    initScale2 = math.sqrt(6.0) / math.sqrt(hiddenDim + hiddenDim)   # classifierDim == hiddenDim (uni-dir)

    def unif(k, shape, s):
        return jax.random.uniform(k, shape, jnp.float32, -s, s)

    # NOTE: initWeights() zeroes the softmaxLayer; we use small random values there
    # (deterministic) so the test output is non-trivial. Forget-gate bias = 1 kept.
    bhh = jnp.zeros((1, 4 * H), jnp.float32).at[0, H:2 * H].set(1.0)
    params = {
        "embedding": unif(ks[0], (vocSize, E), initScale),
        "wih_T": unif(ks[1], (4 * H, E), initScale).T,      # stored transposed for MXU
        "whh_T": unif(ks[2], (4 * H, H), initScale).T,
        "bih": jnp.zeros((1, 4 * H), jnp.float32),
        "bhh": bhh,
        "wh_T": unif(ks[3], (H, H), initScale2).T,          # hiddenLayer.weight^T
        "bh": jnp.zeros((1, H), jnp.float32),
        "ws_T": unif(ks[4], (C, H), 0.05).T,                # softmaxLayer.weight^T
        "bs": jnp.zeros((1, C), jnp.float32),
    }

    batch_input = jax.random.randint(ks[5], (T, B), 0, vocSize, jnp.int32)  # (seq, batch)
    lengths = jnp.array([8, 8, 8, 7, 7, 6, 6, 5, 5, 4, 4, 4, 3, 3, 3, 2], jnp.int32)
    h0 = jnp.zeros((B, H), jnp.float32)
    c0 = jnp.zeros((B, H), jnp.float32)

    out = text_classifier_forward(batch_input, lengths, h0, c0, params)
    out = jax.block_until_ready(out)

    ref = reference_forward(batch_input, lengths, h0, c0, params)
    np.testing.assert_allclose(np.asarray(out), np.asarray(ref), rtol=1e-5, atol=1e-5)

    # TODO(synk): biDirectional=True / repType in {'Ave','Max'} branches not exercised
    # (Ave/Max assert False in the reference module; bi-dir would add a reverse-scan pass).
    print("KERNEL_OK")
</pallas_src>

<mosaic_0001>
module attributes {stable_mosaic.version = 11 : i64} {
  func.func @lstm_classifier_kernel(%arg0: i32, %arg1: memref<8x8x32xf32, #tpu.memory_space<vmem>>, %arg2: memref<8x8x1xf32, #tpu.memory_space<vmem>>, %arg3: memref<32x128xf32, #tpu.memory_space<vmem>>, %arg4: memref<1x128xf32, #tpu.memory_space<vmem>>, %arg5: memref<32x128xf32, #tpu.memory_space<vmem>>, %arg6: memref<32x32xf32, #tpu.memory_space<vmem>>, %arg7: memref<1x32xf32, #tpu.memory_space<vmem>>, %arg8: memref<32x8xf32, #tpu.memory_space<vmem>>, %arg9: memref<1x8xf32, #tpu.memory_space<vmem>>, %arg10: memref<8x32xf32, #tpu.memory_space<vmem>>, %arg11: memref<8x32xf32, #tpu.memory_space<vmem>>, %arg12: memref<8x8xf32, #tpu.memory_space<vmem>>, %arg13: memref<8x8x128xf32, #tpu.memory_space<vmem>>) attributes {dimension_semantics = [#tpu.dimension_semantics<parallel>], iteration_bounds = array<i64: 2>, scalar_prefetch = 0 : i64, scratch_operands = 1 : i64, tpu.core_type = #tpu.core_type<tc>, window_params = [{transform_indices = @transform_0, window_bounds = array<i64: 8, 8, 32>}, {transform_indices = @transform_1, window_bounds = array<i64: 8, 8, 1>}, {pipeline_mode = #tpu.pipeline_mode<synchronous>, transform_indices = @transform_2, window_bounds = array<i64: 32, 128>}, {pipeline_mode = #tpu.pipeline_mode<synchronous>, transform_indices = @transform_3, window_bounds = array<i64: 1, 128>}, {pipeline_mode = #tpu.pipeline_mode<synchronous>, transform_indices = @transform_4, window_bounds = array<i64: 32, 128>}, {pipeline_mode = #tpu.pipeline_mode<synchronous>, transform_indices = @transform_5, window_bounds = array<i64: 32, 32>}, {pipeline_mode = #tpu.pipeline_mode<synchronous>, transform_indices = @transform_6, window_bounds = array<i64: 1, 32>}, {pipeline_mode = #tpu.pipeline_mode<synchronous>, transform_indices = @transform_7, window_bounds = array<i64: 32, 8>}, {pipeline_mode = #tpu.pipeline_mode<synchronous>, transform_indices = @transform_8, window_bounds = array<i64: 1, 8>}, {transform_indices = @transform_9, window_bounds = array<i64: 8, 32>}, {transform_indices = @transform_10, window_bounds = array<i64: 8, 32>}, {transform_indices = @transform_11, window_bounds = array<i64: 8, 8>}]} {
    %c0 = arith.constant 0 : index
    %c0_0 = arith.constant 0 : index
    %c0_1 = arith.constant 0 : index
    %0 = vector.load %arg1[%c0, %c0_0, %c0_1] : memref<8x8x32xf32, #tpu.memory_space<vmem>>, vector<8x8x32xf32>
    %1 = vector.shape_cast %0 : vector<8x8x32xf32> to vector<64x32xf32>
    %c0_2 = arith.constant 0 : index
    %c0_3 = arith.constant 0 : index
    %2 = vector.load %arg3[%c0_2, %c0_3] : memref<32x128xf32, #tpu.memory_space<vmem>>, vector<32x128xf32>
    %cst = arith.constant dense<0.000000e+00> : vector<64x128xf32>
    %3 = tpu.matmul %1, %2, %cst {dimension_numbers = #tpu.dot_dimension_numbers<[1], [0], [0], [1], [0, 0, 1, 1], [], []>} : vector<64x32xf32>, vector<32x128xf32>, vector<64x128xf32> -> vector<64x128xf32>
    %c0_4 = arith.constant 0 : index
    %c0_5 = arith.constant 0 : index
    %4 = vector.load %arg4[%c0_4, %c0_5] : memref<1x128xf32, #tpu.memory_space<vmem>>, vector<1x128xf32>
    %5 = vector.broadcast %4 : vector<1x128xf32> to vector<64x128xf32>
    %6 = arith.addf %3, %5 : vector<64x128xf32>
    %7 = vector.shape_cast %6 : vector<64x128xf32> to vector<8x8x128xf32>
    %c0_6 = arith.constant 0 : index
    %c0_7 = arith.constant 0 : index
    %c0_8 = arith.constant 0 : index
    %8 = vector.load %arg13[%c0_6, %c0_7, %c0_8] : memref<8x8x128xf32, #tpu.memory_space<vmem>>, vector<8x8x128xf32>
    tpu.vector_store %arg13[%c0_6, %c0_7, %c0_8], %7 {strides = array<i32>} : memref<8x8x128xf32, #tpu.memory_space<vmem>>, vector<8x8x128xf32>,
    %c0_9 = arith.constant 0 : index
    %c0_10 = arith.constant 0 : index
    %9 = vector.load %arg5[%c0_9, %c0_10] : memref<32x128xf32, #tpu.memory_space<vmem>>, vector<32x128xf32>
    %10 = tpu.iota {dimensions = array<i32: 1>} : vector<8x128xi32>
    %c64_i32 = arith.constant 64 : i32
    %11 = vector.broadcast %c64_i32 : i32 to vector<8x128xi32>
    %12 = arith.cmpi sge, %10, %11 : vector<8x128xi32>
    %c96_i32 = arith.constant 96 : i32
    %13 = vector.broadcast %c96_i32 : i32 to vector<8x128xi32>
    %14 = arith.cmpi slt, %10, %13 : vector<8x128xi32>
    %15 = arith.andi %12, %14 : vector<8x128xi1>
    %c0_11 = arith.constant 0 : index
    %c0_12 = arith.constant 0 : index
    %16 = vector.load %arg10[%c0_11, %c0_12] : memref<8x32xf32, #tpu.memory_space<vmem>>, vector<8x32xf32>
    %c0_13 = arith.constant 0 : index
    %c0_14 = arith.constant 0 : index
    %17 = vector.load %arg11[%c0_13, %c0_14] : memref<8x32xf32, #tpu.memory_space<vmem>>, vector<8x32xf32>
    %c0_i32 = arith.constant 0 : i32
    %18 = arith.index_cast %c0_i32 : i32 to index
    %c0_15 = arith.constant 0 : index
    %c0_16 = arith.constant 0 : index
    %19 = vector.load %arg13[%18, %c0_15, %c0_16] : memref<8x8x128xf32, #tpu.memory_space<vmem>>, vector<1x8x128xf32>
    %20 = vector.shape_cast %19 : vector<1x8x128xf32> to vector<8x128xf32>
    %cst_17 = arith.constant dense<0.000000e+00> : vector<8x128xf32>
    %21 = tpu.matmul %16, %9, %cst_17 {dimension_numbers = #tpu.dot_dimension_numbers<[1], [0], [0], [1], [0, 0, 1, 1], [], []>} : vector<8x32xf32>, vector<32x128xf32>, vector<8x128xf32> -> vector<8x128xf32>
    %22 = arith.addf %20, %21 : vector<8x128xf32>
    %23 = math.tanh %22 : vector<8x128xf32>
    %24 = arith.negf %22 : vector<8x128xf32>
    %25 = math.exp %24 : vector<8x128xf32>
    %cst_18 = arith.constant 1.000000e+00 : f32
    %26 = vector.broadcast %cst_18 : f32 to vector<8x128xf32>
    %27 = arith.addf %26, %25 : vector<8x128xf32>
    %28 = arith.divf %26, %27 : vector<8x128xf32>
    %29 = arith.select %15, %23, %28 : vector<8x128xi1>, vector<8x128xf32>
    %30 = vector.extract_strided_slice %29 {offsets = [0, 0], sizes = [8, 32], strides = [1, 1]} : vector<8x128xf32> to vector<8x32xf32>
    %31 = vector.extract_strided_slice %29 {offsets = [0, 32], sizes = [8, 32], strides = [1, 1]} : vector<8x128xf32> to vector<8x32xf32>
    %32 = vector.extract_strided_slice %29 {offsets = [0, 64], sizes = [8, 32], strides = [1, 1]} : vector<8x128xf32> to vector<8x32xf32>
    %33 = vector.extract_strided_slice %29 {offsets = [0, 96], sizes = [8, 32], strides = [1, 1]} : vector<8x128xf32> to vector<8x32xf32>
    %34 = arith.mulf %31, %17 : vector<8x32xf32>
    %35 = arith.mulf %30, %32 : vector<8x32xf32>
    %36 = arith.addf %34, %35 : vector<8x32xf32>
    %37 = math.tanh %36 : vector<8x32xf32>
    %38 = arith.mulf %33, %37 : vector<8x32xf32>
    %39 = arith.index_cast %c0_i32 : i32 to index
    %c0_19 = arith.constant 0 : index
    %c0_20 = arith.constant 0 : index
    %40 = vector.load %arg2[%39, %c0_19, %c0_20] : memref<8x8x1xf32, #tpu.memory_space<vmem>>, vector<1x8x1xf32>
    %41 = vector.shape_cast %40 : vector<1x8x1xf32> to vector<8x1xf32>
    %42 = arith.subf %38, %16 : vector<8x32xf32>
    %43 = vector.broadcast %41 : vector<8x1xf32> to vector<8x32xf32>
    %44 = arith.mulf %43, %42 : vector<8x32xf32>
    %45 = arith.addf %16, %44 : vector<8x32xf32>
    %46 = arith.subf %36, %17 : vector<8x32xf32>
    %47 = vector.broadcast %41 : vector<8x1xf32> to vector<8x32xf32>
    %48 = arith.mulf %47, %46 : vector<8x32xf32>
    %49 = arith.addf %17, %48 : vector<8x32xf32>
    %c1_i32 = arith.constant 1 : i32
    %50 = arith.index_cast %c1_i32 : i32 to index
    %c0_21 = arith.constant 0 : index
    %c0_22 = arith.constant 0 : index
    %51 = vector.load %arg13[%50, %c0_21, %c0_22] : memref<8x8x128xf32, #tpu.memory_space<vmem>>, vector<1x8x128xf32>
    %52 = vector.shape_cast %51 : vector<1x8x128xf32> to vector<8x128xf32>
    %cst_23 = arith.constant dense<0.000000e+00> : vector<8x128xf32>
    %53 = tpu.matmul %45, %9, %cst_23 {dimension_numbers = #tpu.dot_dimension_numbers<[1], [0], [0], [1], [0, 0, 1, 1], [], []>} : vector<8x32xf32>, vector<32x128xf32>, vector<8x128xf32> -> vector<8x128xf32>
    %54 = arith.addf %52, %53 : vector<8x128xf32>
    %55 = math.tanh %54 : vector<8x128xf32>
    %56 = arith.negf %54 : vector<8x128xf32>
    %57 = math.exp %56 : vector<8x128xf32>
    %cst_24 = arith.constant 1.000000e+00 : f32
    %58 = vector.broadcast %cst_24 : f32 to vector<8x128xf32>
    %59 = arith.addf %58, %57 : vector<8x128xf32>
    %60 = arith.divf %58, %59 : vector<8x128xf32>
    %61 = arith.select %15, %55, %60 : vector<8x128xi1>, vector<8x128xf32>
    %62 = vector.extract_strided_slice %61 {offsets = [0, 0], sizes = [8, 32], strides = [1, 1]} : vector<8x128xf32> to vector<8x32xf32>
    %63 = vector.extract_strided_slice %61 {offsets = [0, 32], sizes = [8, 32], strides = [1, 1]} : vector<8x128xf32> to vector<8x32xf32>
    %64 = vector.extract_strided_slice %61 {offsets = [0, 64], sizes = [8, 32], strides = [1, 1]} : vector<8x128xf32> to vector<8x32xf32>
    %65 = vector.extract_strided_slice %61 {offsets = [0, 96], sizes = [8, 32], strides = [1, 1]} : vector<8x128xf32> to vector<8x32xf32>
    %66 = arith.mulf %63, %49 : vector<8x32xf32>
    %67 = arith.mulf %62, %64 : vector<8x32xf32>
    %68 = arith.addf %66, %67 : vector<8x32xf32>
    %69 = math.tanh %68 : vector<8x32xf32>
    %70 = arith.mulf %65, %69 : vector<8x32xf32>
    %71 = arith.index_cast %c1_i32 : i32 to index
    %c0_25 = arith.constant 0 : index
    %c0_26 = arith.constant 0 : index
    %72 = vector.load %arg2[%71, %c0_25, %c0_26] : memref<8x8x1xf32, #tpu.memory_space<vmem>>, vector<1x8x1xf32>
    %73 = vector.shape_cast %72 : vector<1x8x1xf32> to vector<8x1xf32>
    %74 = arith.subf %70, %45 : vector<8x32xf32>
    %75 = vector.broadcast %73 : vector<8x1xf32> to vector<8x32xf32>
    %76 = arith.mulf %75, %74 : vector<8x32xf32>
    %77 = arith.addf %45, %76 : vector<8x32xf32>
    %78 = arith.subf %68, %49 : vector<8x32xf32>
    %79 = vector.broadcast %73 : vector<8x1xf32> to vector<8x32xf32>
    %80 = arith.mulf %79, %78 : vector<8x32xf32>
    %81 = arith.addf %49, %80 : vector<8x32xf32>
    %c2_i32 = arith.constant 2 : i32
    %82 = arith.index_cast %c2_i32 : i32 to index
    %c0_27 = arith.constant 0 : index
    %c0_28 = arith.constant 0 : index
    %83 = vector.load %arg13[%82, %c0_27, %c0_28] : memref<8x8x128xf32, #tpu.memory_space<vmem>>, vector<1x8x128xf32>
    %84 = vector.shape_cast %83 : vector<1x8x128xf32> to vector<8x128xf32>
    %cst_29 = arith.constant dense<0.000000e+00> : vector<8x128xf32>
    %85 = tpu.matmul %77, %9, %cst_29 {dimension_numbers = #tpu.dot_dimension_numbers<[1], [0], [0], [1], [0, 0, 1, 1], [], []>} : vector<8x32xf32>, vector<32x128xf32>, vector<8x128xf32> -> vector<8x128xf32>
    %86 = arith.addf %84, %85 : vector<8x128xf32>
    %87 = math.tanh %86 : vector<8x128xf32>
    %88 = arith.negf %86 : vector<8x128xf32>
    %89 = math.exp %88 : vector<8x128xf32>
    %cst_30 = arith.constant 1.000000e+00 : f32
    %90 = vector.broadcast %cst_30 : f32 to vector<8x128xf32>
    %91 = arith.addf %90, %89 : vector<8x128xf32>
    %92 = arith.divf %90, %91 : vector<8x128xf32>
    %93 = arith.select %15, %87, %92 : vector<8x128xi1>, vector<8x128xf32>
    %94 = vector.extract_strided_slice %93 {offsets = [0, 0], sizes = [8, 32], strides = [1, 1]} : vector<8x128xf32> to vector<8x32xf32>
    %95 = vector.extract_strided_slice %93 {offsets = [0, 32], sizes = [8, 32], strides = [1, 1]} : vector<8x128xf32> to vector<8x32xf32>
    %96 = vector.extract_strided_slice %93 {offsets = [0, 64], sizes = [8, 32], strides = [1, 1]} : vector<8x128xf32> to vector<8x32xf32>
    %97 = vector.extract_strided_slice %93 {offsets = [0, 96], sizes = [8, 32], strides = [1, 1]} : vector<8x128xf32> to vector<8x32xf32>
    %98 = arith.mulf %95, %81 : vector<8x32xf32>
    %99 = arith.mulf %94, %96 : vector<8x32xf32>
    %100 = arith.addf %98, %99 : vector<8x32xf32>
    %101 = math.tanh %100 : vector<8x32xf32>
    %102 = arith.mulf %97, %101 : vector<8x32xf32>
    %103 = arith.index_cast %c2_i32 : i32 to index
    %c0_31 = arith.constant 0 : index
    %c0_32 = arith.constant 0 : index
    %104 = vector.load %arg2[%103, %c0_31, %c0_32] : memref<8x8x1xf32, #tpu.memory_space<vmem>>, vector<1x8x1xf32>
    %105 = vector.shape_cast %104 : vector<1x8x1xf32> to vector<8x1xf32>
    %106 = arith.subf %102, %77 : vector<8x32xf32>
    %107 = vector.broadcast %105 : vector<8x1xf32> to vector<8x32xf32>
    %108 = arith.mulf %107, %106 : vector<8x32xf32>
    %109 = arith.addf %77, %108 : vector<8x32xf32>
    %110 = arith.subf %100, %81 : vector<8x32xf32>
    %111 = vector.broadcast %105 : vector<8x1xf32> to vector<8x32xf32>
    %112 = arith.mulf %111, %110 : vector<8x32xf32>
    %113 = arith.addf %81, %112 : vector<8x32xf32>
    %c3_i32 = arith.constant 3 : i32
    %114 = arith.index_cast %c3_i32 : i32 to index
    %c0_33 = arith.constant 0 : index
    %c0_34 = arith.constant 0 : index
    %115 = vector.load %arg13[%114, %c0_33, %c0_34] : memref<8x8x128xf32, #tpu.memory_space<vmem>>, vector<1x8x128xf32>
    %116 = vector.shape_cast %115 : vector<1x8x128xf32> to vector<8x128xf32>
    %cst_35 = arith.constant dense<0.000000e+00> : vector<8x128xf32>
    %117 = tpu.matmul %109, %9, %cst_35 {dimension_numbers = #tpu.dot_dimension_numbers<[1], [0], [0], [1], [0, 0, 1, 1], [], []>} : vector<8x32xf32>, vector<32x128xf32>, vector<8x128xf32> -> vector<8x128xf32>
    %118 = arith.addf %116, %117 : vector<8x128xf32>
    %119 = math.tanh %118 : vector<8x128xf32>
    %120 = arith.negf %118 : vector<8x128xf32>
    %121 = math.exp %120 : vector<8x128xf32>
    %cst_36 = arith.constant 1.000000e+00 : f32
    %122 = vector.broadcast %cst_36 : f32 to vector<8x128xf32>
    %123 = arith.addf %122, %121 : vector<8x128xf32>
    %124 = arith.divf %122, %123 : vector<8x128xf32>
    %125 = arith.select %15, %119, %124 : vector<8x128xi1>, vector<8x128xf32>
    %126 = vector.extract_strided_slice %125 {offsets = [0, 0], sizes = [8, 32], strides = [1, 1]} : vector<8x128xf32> to vector<8x32xf32>
    %127 = vector.extract_strided_slice %125 {offsets = [0, 32], sizes = [8, 32], strides = [1, 1]} : vector<8x128xf32> to vector<8x32xf32>
    %128 = vector.extract_strided_slice %125 {offsets = [0, 64], sizes = [8, 32], strides = [1, 1]} : vector<8x128xf32> to vector<8x32xf32>
    %129 = vector.extract_strided_slice %125 {offsets = [0, 96], sizes = [8, 32], strides = [1, 1]} : vector<8x128xf32> to vector<8x32xf32>
    %130 = arith.mulf %127, %113 : vector<8x32xf32>
    %131 = arith.mulf %126, %128 : vector<8x32xf32>
    %132 = arith.addf %130, %131 : vector<8x32xf32>
    %133 = math.tanh %132 : vector<8x32xf32>
    %134 = arith.mulf %129, %133 : vector<8x32xf32>
    %135 = arith.index_cast %c3_i32 : i32 to index
    %c0_37 = arith.constant 0 : index
    %c0_38 = arith.constant 0 : index
    %136 = vector.load %arg2[%135, %c0_37, %c0_38] : memref<8x8x1xf32, #tpu.memory_space<vmem>>, vector<1x8x1xf32>
    %137 = vector.shape_cast %136 : vector<1x8x1xf32> to vector<8x1xf32>
    %138 = arith.subf %134, %109 : vector<8x32xf32>
    %139 = vector.broadcast %137 : vector<8x1xf32> to vector<8x32xf32>
    %140 = arith.mulf %139, %138 : vector<8x32xf32>
    %141 = arith.addf %109, %140 : vector<8x32xf32>
    %142 = arith.subf %132, %113 : vector<8x32xf32>
    %143 = vector.broadcast %137 : vector<8x1xf32> to vector<8x32xf32>
    %144 = arith.mulf %143, %142 : vector<8x32xf32>
    %145 = arith.addf %113, %144 : vector<8x32xf32>
    %c4_i32 = arith.constant 4 : i32
    %146 = arith.index_cast %c4_i32 : i32 to index
    %c0_39 = arith.constant 0 : index
    %c0_40 = arith.constant 0 : index
    %147 = vector.load %arg13[%146, %c0_39, %c0_40] : memref<8x8x128xf32, #tpu.memory_space<vmem>>, vector<1x8x128xf32>
    %148 = vector.shape_cast %147 : vector<1x8x128xf32> to vector<8x128xf32>
    %cst_41 = arith.constant dense<0.000000e+00> : vector<8x128xf32>
    %149 = tpu.matmul %141, %9, %cst_41 {dimension_numbers = #tpu.dot_dimension_numbers<[1], [0], [0], [1], [0, 0, 1, 1], [], []>} : vector<8x32xf32>, vector<32x128xf32>, vector<8x128xf32> -> vector<8x128xf32>
    %150 = arith.addf %148, %149 : vector<8x128xf32>
    %151 = math.tanh %150 : vector<8x128xf32>
    %152 = arith.negf %150 : vector<8x128xf32>
    %153 = math.exp %152 : vector<8x128xf32>
    %cst_42 = arith.constant 1.000000e+00 : f32
    %154 = vector.broadcast %cst_42 : f32 to vector<8x128xf32>
    %155 = arith.addf %154, %153 : vector<8x128xf32>
    %156 = arith.divf %154, %155 : vector<8x128xf32>
    %157 = arith.select %15, %151, %156 : vector<8x128xi1>, vector<8x128xf32>
    %158 = vector.extract_strided_slice %157 {offsets = [0, 0], sizes = [8, 32], strides = [1, 1]} : vector<8x128xf32> to vector<8x32xf32>
    %159 = vector.extract_strided_slice %157 {offsets = [0, 32], sizes = [8, 32], strides = [1, 1]} : vector<8x128xf32> to vector<8x32xf32>
    %160 = vector.extract_strided_slice %157 {offsets = [0, 64], sizes = [8, 32], strides = [1, 1]} : vector<8x128xf32> to vector<8x32xf32>
    %161 = vector.extract_strided_slice %157 {offsets = [0, 96], sizes = [8, 32], strides = [1, 1]} : vector<8x128xf32> to vector<8x32xf32>
    %162 = arith.mulf %159, %145 : vector<8x32xf32>
    %163 = arith.mulf %158, %160 : vector<8x32xf32>
    %164 = arith.addf %162, %163 : vector<8x32xf32>
    %165 = math.tanh %164 : vector<8x32xf32>
    %166 = arith.mulf %161, %165 : vector<8x32xf32>
    %167 = arith.index_cast %c4_i32 : i32 to index
    %c0_43 = arith.constant 0 : index
    %c0_44 = arith.constant 0 : index
    %168 = vector.load %arg2[%167, %c0_43, %c0_44] : memref<8x8x1xf32, #tpu.memory_space<vmem>>, vector<1x8x1xf32>
    %169 = vector.shape_cast %168 : vector<1x8x1xf32> to vector<8x1xf32>
    %170 = arith.subf %166, %141 : vector<8x32xf32>
    %171 = vector.broadcast %169 : vector<8x1xf32> to vector<8x32xf32>
    %172 = arith.mulf %171, %170 : vector<8x32xf32>
    %173 = arith.addf %141, %172 : vector<8x32xf32>
    %174 = arith.subf %164, %145 : vector<8x32xf32>
    %175 = vector.broadcast %169 : vector<8x1xf32> to vector<8x32xf32>
    %176 = arith.mulf %175, %174 : vector<8x32xf32>
    %177 = arith.addf %145, %176 : vector<8x32xf32>
    %c5_i32 = arith.constant 5 : i32
    %178 = arith.index_cast %c5_i32 : i32 to index
    %c0_45 = arith.constant 0 : index
    %c0_46 = arith.constant 0 : index
    %179 = vector.load %arg13[%178, %c0_45, %c0_46] : memref<8x8x128xf32, #tpu.memory_space<vmem>>, vector<1x8x128xf32>
    %180 = vector.shape_cast %179 : vector<1x8x128xf32> to vector<8x128xf32>
    %cst_47 = arith.constant dense<0.000000e+00> : vector<8x128xf32>
    %181 = tpu.matmul %173, %9, %cst_47 {dimension_numbers = #tpu.dot_dimension_numbers<[1], [0], [0], [1], [0, 0, 1, 1], [], []>} : vector<8x32xf32>, vector<32x128xf32>, vector<8x128xf32> -> vector<8x128xf32>
    %182 = arith.addf %180, %181 : vector<8x128xf32>
    %183 = math.tanh %182 : vector<8x128xf32>
    %184 = arith.negf %182 : vector<8x128xf32>
    %185 = math.exp %184 : vector<8x128xf32>
    %cst_48 = arith.constant 1.000000e+00 : f32
    %186 = vector.broadcast %cst_48 : f32 to vector<8x128xf32>
    %187 = arith.addf %186, %185 : vector<8x128xf32>
    %188 = arith.divf %186, %187 : vector<8x128xf32>
    %189 = arith.select %15, %183, %188 : vector<8x128xi1>, vector<8x128xf32>
    %190 = vector.extract_strided_slice %189 {offsets = [0, 0], sizes = [8, 32], strides = [1, 1]} : vector<8x128xf32> to vector<8x32xf32>
    %191 = vector.extract_strided_slice %189 {offsets = [0, 32], sizes = [8, 32], strides = [1, 1]} : vector<8x128xf32> to vector<8x32xf32>
    %192 = vector.extract_strided_slice %189 {offsets = [0, 64], sizes = [8, 32], strides = [1, 1]} : vector<8x128xf32> to vector<8x32xf32>
    %193 = vector.extract_strided_slice %189 {offsets = [0, 96], sizes = [8, 32], strides = [1, 1]} : vector<8x128xf32> to vector<8x32xf32>
    %194 = arith.mulf %191, %177 : vector<8x32xf32>
    %195 = arith.mulf %190, %192 : vector<8x32xf32>
    %196 = arith.addf %194, %195 : vector<8x32xf32>
    %197 = math.tanh %196 : vector<8x32xf32>
    %198 = arith.mulf %193, %197 : vector<8x32xf32>
    %199 = arith.index_cast %c5_i32 : i32 to index
    %c0_49 = arith.constant 0 : index
    %c0_50 = arith.constant 0 : index
    %200 = vector.load %arg2[%199, %c0_49, %c0_50] : memref<8x8x1xf32, #tpu.memory_space<vmem>>, vector<1x8x1xf32>
    %201 = vector.shape_cast %200 : vector<1x8x1xf32> to vector<8x1xf32>
    %202 = arith.subf %198, %173 : vector<8x32xf32>
    %203 = vector.broadcast %201 : vector<8x1xf32> to vector<8x32xf32>
    %204 = arith.mulf %203, %202 : vector<8x32xf32>
    %205 = arith.addf %173, %204 : vector<8x32xf32>
    %206 = arith.subf %196, %177 : vector<8x32xf32>
    %207 = vector.broadcast %201 : vector<8x1xf32> to vector<8x32xf32>
    %208 = arith.mulf %207, %206 : vector<8x32xf32>
    %209 = arith.addf %177, %208 : vector<8x32xf32>
    %c6_i32 = arith.constant 6 : i32
    %210 = arith.index_cast %c6_i32 : i32 to index
    %c0_51 = arith.constant 0 : index
    %c0_52 = arith.constant 0 : index
    %211 = vector.load %arg13[%210, %c0_51, %c0_52] : memref<8x8x128xf32, #tpu.memory_space<vmem>>, vector<1x8x128xf32>
    %212 = vector.shape_cast %211 : vector<1x8x128xf32> to vector<8x128xf32>
    %cst_53 = arith.constant dense<0.000000e+00> : vector<8x128xf32>
    %213 = tpu.matmul %205, %9, %cst_53 {dimension_numbers = #tpu.dot_dimension_numbers<[1], [0], [0], [1], [0, 0, 1, 1], [], []>} : vector<8x32xf32>, vector<32x128xf32>, vector<8x128xf32> -> vector<8x128xf32>
    %214 = arith.addf %212, %213 : vector<8x128xf32>
    %215 = math.tanh %214 : vector<8x128xf32>
    %216 = arith.negf %214 : vector<8x128xf32>
    %217 = math.exp %216 : vector<8x128xf32>
    %cst_54 = arith.constant 1.000000e+00 : f32
    %218 = vector.broadcast %cst_54 : f32 to vector<8x128xf32>
    %219 = arith.addf %218, %217 : vector<8x128xf32>
    %220 = arith.divf %218, %219 : vector<8x128xf32>
    %221 = arith.select %15, %215, %220 : vector<8x128xi1>, vector<8x128xf32>
    %222 = vector.extract_strided_slice %221 {offsets = [0, 0], sizes = [8, 32], strides = [1, 1]} : vector<8x128xf32> to vector<8x32xf32>
    %223 = vector.extract_strided_slice %221 {offsets = [0, 32], sizes = [8, 32], strides = [1, 1]} : vector<8x128xf32> to vector<8x32xf32>
    %224 = vector.extract_strided_slice %221 {offsets = [0, 64], sizes = [8, 32], strides = [1, 1]} : vector<8x128xf32> to vector<8x32xf32>
    %225 = vector.extract_strided_slice %221 {offsets = [0, 96], sizes = [8, 32], strides = [1, 1]} : vector<8x128xf32> to vector<8x32xf32>
    %226 = arith.mulf %223, %209 : vector<8x32xf32>
    %227 = arith.mulf %222, %224 : vector<8x32xf32>
    %228 = arith.addf %226, %227 : vector<8x32xf32>
    %229 = math.tanh %228 : vector<8x32xf32>
    %230 = arith.mulf %225, %229 : vector<8x32xf32>
    %231 = arith.index_cast %c6_i32 : i32 to index
    %c0_55 = arith.constant 0 : index
    %c0_56 = arith.constant 0 : index
    %232 = vector.load %arg2[%231, %c0_55, %c0_56] : memref<8x8x1xf32, #tpu.memory_space<vmem>>, vector<1x8x1xf32>
    %233 = vector.shape_cast %232 : vector<1x8x1xf32> to vector<8x1xf32>
    %234 = arith.subf %230, %205 : vector<8x32xf32>
    %235 = vector.broadcast %233 : vector<8x1xf32> to vector<8x32xf32>
    %236 = arith.mulf %235, %234 : vector<8x32xf32>
    %237 = arith.addf %205, %236 : vector<8x32xf32>
    %238 = arith.subf %228, %209 : vector<8x32xf32>
    %239 = vector.broadcast %233 : vector<8x1xf32> to vector<8x32xf32>
    %240 = arith.mulf %239, %238 : vector<8x32xf32>
    %241 = arith.addf %209, %240 : vector<8x32xf32>
    %c7_i32 = arith.constant 7 : i32
    %242 = arith.index_cast %c7_i32 : i32 to index
    %c0_57 = arith.constant 0 : index
    %c0_58 = arith.constant 0 : index
    %243 = vector.load %arg13[%242, %c0_57, %c0_58] : memref<8x8x128xf32, #tpu.memory_space<vmem>>, vector<1x8x128xf32>
    %244 = vector.shape_cast %243 : vector<1x8x128xf32> to vector<8x128xf32>
    %cst_59 = arith.constant dense<0.000000e+00> : vector<8x128xf32>
    %245 = tpu.matmul %237, %9, %cst_59 {dimension_numbers = #tpu.dot_dimension_numbers<[1], [0], [0], [1], [0, 0, 1, 1], [], []>} : vector<8x32xf32>, vector<32x128xf32>, vector<8x128xf32> -> vector<8x128xf32>
    %246 = arith.addf %244, %245 : vector<8x128xf32>
    %247 = math.tanh %246 : vector<8x128xf32>
    %248 = arith.negf %246 : vector<8x128xf32>
    %249 = math.exp %248 : vector<8x128xf32>
    %cst_60 = arith.constant 1.000000e+00 : f32
    %250 = vector.broadcast %cst_60 : f32 to vector<8x128xf32>
    %251 = arith.addf %250, %249 : vector<8x128xf32>
    %252 = arith.divf %250, %251 : vector<8x128xf32>
    %253 = arith.select %15, %247, %252 : vector<8x128xi1>, vector<8x128xf32>
    %254 = vector.extract_strided_slice %253 {offsets = [0, 0], sizes = [8, 32], strides = [1, 1]} : vector<8x128xf32> to vector<8x32xf32>
    %255 = vector.extract_strided_slice %253 {offsets = [0, 32], sizes = [8, 32], strides = [1, 1]} : vector<8x128xf32> to vector<8x32xf32>
    %256 = vector.extract_strided_slice %253 {offsets = [0, 64], sizes = [8, 32], strides = [1, 1]} : vector<8x128xf32> to vector<8x32xf32>
    %257 = vector.extract_strided_slice %253 {offsets = [0, 96], sizes = [8, 32], strides = [1, 1]} : vector<8x128xf32> to vector<8x32xf32>
    %258 = arith.mulf %255, %241 : vector<8x32xf32>
    %259 = arith.mulf %254, %256 : vector<8x32xf32>
    %260 = arith.addf %258, %259 : vector<8x32xf32>
    %261 = math.tanh %260 : vector<8x32xf32>
    %262 = arith.mulf %257, %261 : vector<8x32xf32>
    %263 = arith.index_cast %c7_i32 : i32 to index
    %c0_61 = arith.constant 0 : index
    %c0_62 = arith.constant 0 : index
    %264 = vector.load %arg2[%263, %c0_61, %c0_62] : memref<8x8x1xf32, #tpu.memory_space<vmem>>, vector<1x8x1xf32>
    %265 = vector.shape_cast %264 : vector<1x8x1xf32> to vector<8x1xf32>
    %266 = arith.subf %262, %237 : vector<8x32xf32>
    %267 = vector.broadcast %265 : vector<8x1xf32> to vector<8x32xf32>
    %268 = arith.mulf %267, %266 : vector<8x32xf32>
    %269 = arith.addf %237, %268 : vector<8x32xf32>
    %270 = arith.subf %260, %241 : vector<8x32xf32>
    %271 = vector.broadcast %265 : vector<8x1xf32> to vector<8x32xf32>
    %272 = arith.mulf %271, %270 : vector<8x32xf32>
    %273 = arith.addf %241, %272 : vector<8x32xf32>
    %c8_i32 = arith.constant 8 : i32
    %c0_63 = arith.constant 0 : index
    %c0_64 = arith.constant 0 : index
    %274 = vector.load %arg6[%c0_63, %c0_64] : memref<32x32xf32, #tpu.memory_space<vmem>>, vector<32x32xf32>
    %cst_65 = arith.constant dense<0.000000e+00> : vector<8x32xf32>
    %275 = tpu.matmul %269, %274, %cst_65 {dimension_numbers = #tpu.dot_dimension_numbers<[1], [0], [0], [1], [0, 0, 1, 1], [], []>} : vector<8x32xf32>, vector<32x32xf32>, vector<8x32xf32> -> vector<8x32xf32>
    %c0_66 = arith.constant 0 : index
    %c0_67 = arith.constant 0 : index
    %276 = vector.load %arg7[%c0_66, %c0_67] : memref<1x32xf32, #tpu.memory_space<vmem>>, vector<1x32xf32>
    %277 = vector.broadcast %276 : vector<1x32xf32> to vector<8x32xf32>
    %278 = arith.addf %275, %277 : vector<8x32xf32>
    %279 = math.tanh %278 : vector<8x32xf32>
    %c0_68 = arith.constant 0 : index
    %c0_69 = arith.constant 0 : index
    %280 = vector.load %arg8[%c0_68, %c0_69] : memref<32x8xf32, #tpu.memory_space<vmem>>, vector<32x8xf32>
    %cst_70 = arith.constant dense<0.000000e+00> : vector<8x8xf32>
    %281 = tpu.matmul %279, %280, %cst_70 {dimension_numbers = #tpu.dot_dimension_numbers<[1], [0], [0], [1], [0, 0, 1, 1], [], []>} : vector<8x32xf32>, vector<32x8xf32>, vector<8x8xf32> -> vector<8x8xf32>
    %c0_71 = arith.constant 0 : index
    %c0_72 = arith.constant 0 : index
    %282 = vector.load %arg9[%c0_71, %c0_72] : memref<1x8xf32, #tpu.memory_space<vmem>>, vector<1x8xf32>
    %283 = vector.broadcast %282 : vector<1x8xf32> to vector<8x8xf32>
    %284 = arith.addf %281, %283 : vector<8x8xf32>
    %c0_73 = arith.constant 0 : index
    %c0_74 = arith.constant 0 : index
    %285 = vector.load %arg12[%c0_73, %c0_74] : memref<8x8xf32, #tpu.memory_space<vmem>>, vector<8x8xf32>
    tpu.vector_store %arg12[%c0_73, %c0_74], %284 {strides = array<i32>} : memref<8x8xf32, #tpu.memory_space<vmem>>, vector<8x8xf32>,
    return
  }
  func.func @transform_0(%arg0: i32) -> (i32, i32, i32) {
    %c0_i32 = arith.constant 0 : i32
    %c0_i32_0 = arith.constant 0 : i32
    %c0_i32_1 = arith.constant 0 : i32
    return %c0_i32, %arg0, %c0_i32_0 : i32, i32, i32
  }
  func.func @transform_1(%arg0: i32) -> (i32, i32, i32) {
    %c0_i32 = arith.constant 0 : i32
    %c0_i32_0 = arith.constant 0 : i32
    %c0_i32_1 = arith.constant 0 : i32
    return %c0_i32, %arg0, %c0_i32_0 : i32, i32, i32
  }
  func.func @transform_2(%arg0: i32) -> (i32, i32) {
    %c0_i32 = arith.constant 0 : i32
    %c0_i32_0 = arith.constant 0 : i32
    %c0_i32_1 = arith.constant 0 : i32
    return %c0_i32, %c0_i32_0 : i32, i32
  }
  func.func @transform_3(%arg0: i32) -> (i32, i32) {
    %c0_i32 = arith.constant 0 : i32
    %c0_i32_0 = arith.constant 0 : i32
    %c0_i32_1 = arith.constant 0 : i32
    return %c0_i32, %c0_i32_0 : i32, i32
  }
  func.func @transform_4(%arg0: i32) -> (i32, i32) {
    %c0_i32 = arith.constant 0 : i32
    %c0_i32_0 = arith.constant 0 : i32
    %c0_i32_1 = arith.constant 0 : i32
    return %c0_i32, %c0_i32_0 : i32, i32
  }
  func.func @transform_5(%arg0: i32) -> (i32, i32) {
    %c0_i32 = arith.constant 0 : i32
    %c0_i32_0 = arith.constant 0 : i32
    %c0_i32_1 = arith.constant 0 : i32
    return %c0_i32, %c0_i32_0 : i32, i32
  }
  func.func @transform_6(%arg0: i32) -> (i32, i32) {
    %c0_i32 = arith.constant 0 : i32
    %c0_i32_0 = arith.constant 0 : i32
    %c0_i32_1 = arith.constant 0 : i32
    return %c0_i32, %c0_i32_0 : i32, i32
  }
  func.func @transform_7(%arg0: i32) -> (i32, i32) {
    %c0_i32 = arith.constant 0 : i32
    %c0_i32_0 = arith.constant 0 : i32
    %c0_i32_1 = arith.constant 0 : i32
    return %c0_i32, %c0_i32_0 : i32, i32
  }
  func.func @transform_8(%arg0: i32) -> (i32, i32) {
    %c0_i32 = arith.constant 0 : i32
    %c0_i32_0 = arith.constant 0 : i32
    %c0_i32_1 = arith.constant 0 : i32
    return %c0_i32, %c0_i32_0 : i32, i32
  }
  func.func @transform_9(%arg0: i32) -> (i32, i32) {
    %c0_i32 = arith.constant 0 : i32
    %c0_i32_0 = arith.constant 0 : i32
    return %arg0, %c0_i32 : i32, i32
  }
  func.func @transform_10(%arg0: i32) -> (i32, i32) {
    %c0_i32 = arith.constant 0 : i32
    %c0_i32_0 = arith.constant 0 : i32
    return %arg0, %c0_i32 : i32, i32
  }
  func.func @transform_11(%arg0: i32) -> (i32, i32) {
    %c0_i32 = arith.constant 0 : i32
    %c0_i32_0 = arith.constant 0 : i32
    return %arg0, %c0_i32 : i32, i32
  }
}

</mosaic_0001>

<llo_original>
// kernel: tpu_custom_call.1
$region0: #{tpu_custom_call.1}
  #allocation0 [shape = 'u32[]', space=smem, size = 0x4, offset = 0x4, fixed_abs, tag = 'smem constant byte address 0x4 - core index']
  #allocation1 [shape = 'u32[72,128]{1,0:T(1,128)}', space=vmem, size = 0x9000, scoped, tag = 'internal scratch']
  #allocation2 [shape = 'f32[8,8,128]{2,1,0:T(8,128)}', space=vmem, size = 0x8000, scoped, tag = 'scratch operand']
  %s0 = inlined_call_operand.vmem [shape: f32[8,16,32], index: 0, kind: input, shape index: {}]
  %s1 = inlined_call_operand.vmem [shape: f32[8,16,1], index: 1, kind: input, shape index: {}]
  %s2 = inlined_call_operand.vmem [shape: f32[32,128], index: 2, kind: input, shape index: {}]
  %s3 = inlined_call_operand.vmem [shape: f32[1,128], index: 3, kind: input, shape index: {}]
  %s4 = inlined_call_operand.hbm [shape: f32[32,128], index: 4, kind: input, shape index: {}]
  %s5 = inlined_call_operand.hbm [shape: f32[32,32], index: 5, kind: input, shape index: {}]
  %s6 = inlined_call_operand.hbm [shape: f32[1,32], index: 6, kind: input, shape index: {}]
  %s7 = inlined_call_operand.vmem [shape: f32[32,8], index: 7, kind: input, shape index: {}]
  %s8 = inlined_call_operand.hbm [shape: f32[1,8], index: 8, kind: input, shape index: {}]
  %s9 = inlined_call_operand.hbm [shape: f32[16,32], index: 9, kind: input, shape index: {}]
  %s10 = inlined_call_operand.vmem [shape: f32[16,32], index: 10, kind: input, shape index: {}]
  %s11 = inlined_call_operand.vmem [shape: f32[16,8], index: 11, kind: output, shape index: {}]
  %s12 = sld [smem:[#allocation0]]
  $region173: #{tpu_custom_call.1} parent=0
    _
  %s14 = ssub.s32 1, %s12
  %s15 = scalar_select 0, %s14, %s12
  $region1: #{tpu_custom_call.1} parent=0
    #allocation3 [shape = 'u8[65536]{0}', space=vmem, size = 0x10000, scoped, tag = 'input window, operand 0']
    #allocation4 [shape = 'u8[65536]{0}', space=vmem, size = 0x10000, scoped, tag = 'input window, operand 1']
    #allocation5 [shape = 'u8[16384]{0}', space=vmem, size = 0x4000, scoped, tag = 'input window, operand 4, single buffered']
    #allocation6 [shape = 's32[2]{0}', space=sflag, size = 0x8, scoped, tag = 'scoped memory for tpu_custom_call.1']
    #allocation7 [shape = 'u8[16384]{0}', space=vmem, size = 0x4000, scoped, tag = 'input window, operand 5, single buffered']
    #allocation8 [shape = 's32[1]{0}', space=sflag, size = 0x4, scoped, tag = 'scoped memory for tpu_custom_call.1']
    #allocation9 [shape = 'u8[512]{0}', space=vmem, size = 0x400, scoped, tag = 'input window, operand 6, single buffered']
    #allocation10 [shape = 'u8[512]{0}', space=vmem, size = 0x400, scoped, tag = 'input window, operand 8, single buffered']
    #allocation11 [shape = 's32[1]{0}', space=sflag, size = 0x4, scoped, tag = 'scoped memory for tpu_custom_call.1']
    #allocation12 [shape = 'u8[8192]{0}', space=vmem, size = 0x2000, scoped, tag = 'input window, operand 9']
    %16 = vsyncpa [#allocation6], 0
    %17 = vsyncpa [#allocation8], 0
    %18 = vsyncpa [#allocation11], 0
    loop: start=0, step=1, limit=4
    $region2: #{tpu_custom_call.1} parent=1 // loop_pre_header
      _
    $region3: #{tpu_custom_call.1} parent=1 // loop_header
      %s20 = sphi 0, %s24
      %p21 = scmp.ge.s32.totalorder %s20, 4
      %s30 = sphi 0, %s32
      %s33 = sphi 0, %s30
      %s34 = sphi 0, %s33
      %s50 = sphi 0, %s34
      %s56 = sphi 0, %s58
      %s59 = sphi 0, %s56
      %s60 = sphi 0, %s59
      %s76 = sphi 0, %s60
      %s80 = sphi 0, %s80
      %s82 = sphi 0, %s80
      %s83 = sphi 0, %s82
      %s97 = sphi 0, %s83
      %s101 = sphi 0, %s101
      %s103 = sphi 0, %s101
      %s104 = sphi 0, %s103
      %s118 = sphi 0, %s104
      %s122 = sphi 0, %s122
      %s124 = sphi 0, %s122
      %s125 = sphi 0, %s124
      %s139 = sphi 0, %s125
      %s143 = sphi 0, %s143
      %s145 = sphi 0, %s143
      %s146 = sphi 0, %s145
      %s160 = sphi 0, %s146
      %s164 = sphi 0, %s164
      %s166 = sphi 0, %s164
      %s167 = sphi 0, %s166
      %s181 = sphi 0, %s167
      %s185 = sphi 0, %s185
      %s187 = sphi 0, %s185
      %s188 = sphi 0, %s187
      %s202 = sphi 0, %s188
      %s206 = sphi 0, %s206
      %s208 = sphi 0, %s206
      %s209 = sphi 0, %s208
      %s223 = sphi 0, %s209
      %s229 = sphi 0, %s231
      %s232 = sphi 0, %s229
      %s233 = sphi 0, %s232
      %s249 = sphi 0, %s233
      %s255 = sphi 0, %s257
      %s258 = sphi 0, %s255
      %s259 = sphi 0, %s258
      %s275 = sphi 0, %s259
      %s281 = sphi 0, %s283
      %s284 = sphi 0, %s281
      %s285 = sphi 0, %s284
      %s301 = sphi 0, %s285
    $region4: #{tpu_custom_call.1} parent=1 // loop_header_branch
      %23 = sbr.rel (%p21) target = $region8
    $region5: #{tpu_custom_call.1} parent=1 // loop_body
      %s25 = ssub.s32 %s20, 1
      %s26 = ssub.s32 %s20, 2
      %s27 = sadd.s32 %s20, 1
      %s28 = ssub.s32 %s20, %s27
      %p29 = scmp.eq.s32.totalorder %s28, 0
      %s31 = sadd.s32 %s30, 1
      %s32 = scalar_select %p29, %s30, %s31
      %p35 = pneg %p29
      %p36 = scmp.eq.s32.totalorder %s20, 1
      %p37 = por %p35, %p36
      %p38 = scmp.ne.s32.totalorder %s30, %s33
      %p39 = scmp.eq.s32.totalorder %s20, 0
      %p40 = por %p38, %p39
      %p41 = scmp.ne.s32.totalorder %s30, %s33
      %p42 = scmp.eq.s32.totalorder %s25, 1
      %p43 = por %p41, %p42
      %p44 = scmp.ne.s32.totalorder %s33, %s34
      %p45 = scmp.eq.s32.totalorder %s25, 0
      %p46 = por %p44, %p45
      %p47 = scmp.ne.s32.totalorder %s33, %s34
      %p48 = scmp.eq.s32.totalorder %s26, 1
      %p49 = por %p47, %p48
      %p51 = scmp.ne.s32.totalorder %s34, %s50
      %p52 = scmp.eq.s32.totalorder %s26, 0
      %p53 = por %p51, %p52
      %s54 = ssub.s32 %s20, %s27
      %p55 = scmp.eq.s32.totalorder %s54, 0
      %s57 = sadd.s32 %s56, 1
      %s58 = scalar_select %p55, %s56, %s57
      %p61 = pneg %p55
      %p62 = scmp.eq.s32.totalorder %s20, 1
      %p63 = por %p61, %p62
      %p64 = scmp.ne.s32.totalorder %s56, %s59
      %p65 = scmp.eq.s32.totalorder %s20, 0
      %p66 = por %p64, %p65
      %p67 = scmp.ne.s32.totalorder %s56, %s59
      %p68 = scmp.eq.s32.totalorder %s25, 1
      %p69 = por %p67, %p68
      %p70 = scmp.ne.s32.totalorder %s59, %s60
      %p71 = scmp.eq.s32.totalorder %s25, 0
      %p72 = por %p70, %p71
      %p73 = scmp.ne.s32.totalorder %s59, %s60
      %p74 = scmp.eq.s32.totalorder %s26, 1
      %p75 = por %p73, %p74
      %p77 = scmp.ne.s32.totalorder %s60, %s76
      %p78 = scmp.eq.s32.totalorder %s26, 0
      %p79 = por %p77, %p78
      %s81 = sadd.s32 %s80, 1
      %p84 = scmp.eq.s32.totalorder %s20, 1
      %p85 = scmp.ne.s32.totalorder %s80, %s82
      %p86 = scmp.eq.s32.totalorder %s20, 0
      %p87 = por %p85, %p86
      %p88 = scmp.ne.s32.totalorder %s80, %s82
      %p89 = scmp.eq.s32.totalorder %s25, 1
      %p90 = por %p88, %p89
      %p91 = scmp.ne.s32.totalorder %s82, %s83
      %p92 = scmp.eq.s32.totalorder %s25, 0
      %p93 = por %p91, %p92
      %p94 = scmp.ne.s32.totalorder %s82, %s83
      %p95 = scmp.eq.s32.totalorder %s26, 1
      %p96 = por %p94, %p95
      %p98 = scmp.ne.s32.totalorder %s83, %s97
      %p99 = scmp.eq.s32.totalorder %s26, 0
      %p100 = por %p98, %p99
      %s102 = sadd.s32 %s101, 1
      %p105 = scmp.eq.s32.totalorder %s20, 1
      %p106 = scmp.ne.s32.totalorder %s101, %s103
      %p107 = scmp.eq.s32.totalorder %s20, 0
      %p108 = por %p106, %p107
      %p109 = scmp.ne.s32.totalorder %s101, %s103
      %p110 = scmp.eq.s32.totalorder %s25, 1
      %p111 = por %p109, %p110
      %p112 = scmp.ne.s32.totalorder %s103, %s104
      %p113 = scmp.eq.s32.totalorder %s25, 0
      %p114 = por %p112, %p113
      %p115 = scmp.ne.s32.totalorder %s103, %s104
      %p116 = scmp.eq.s32.totalorder %s26, 1
      %p117 = por %p115, %p116
      %p119 = scmp.ne.s32.totalorder %s104, %s118
      %p120 = scmp.eq.s32.totalorder %s26, 0
      %p121 = por %p119, %p120
      %s123 = sadd.s32 %s122, 1
      %p126 = scmp.eq.s32.totalorder %s20, 1
      %p127 = scmp.ne.s32.totalorder %s122, %s124
      %p128 = scmp.eq.s32.totalorder %s20, 0
      %p129 = por %p127, %p128
      %p130 = scmp.ne.s32.totalorder %s122, %s124
      %p131 = scmp.eq.s32.totalorder %s25, 1
      %p132 = por %p130, %p131
      %p133 = scmp.ne.s32.totalorder %s124, %s125
      %p134 = scmp.eq.s32.totalorder %s25, 0
      %p135 = por %p133, %p134
      %p136 = scmp.ne.s32.totalorder %s124, %s125
      %p137 = scmp.eq.s32.totalorder %s26, 1
      %p138 = por %p136, %p137
      %p140 = scmp.ne.s32.totalorder %s125, %s139
      %p141 = scmp.eq.s32.totalorder %s26, 0
      %p142 = por %p140, %p141
      %s144 = sadd.s32 %s143, 1
      %p147 = scmp.eq.s32.totalorder %s20, 1
      %p148 = scmp.ne.s32.totalorder %s143, %s145
      %p149 = scmp.eq.s32.totalorder %s20, 0
      %p150 = por %p148, %p149
      %p151 = scmp.ne.s32.totalorder %s143, %s145
      %p152 = scmp.eq.s32.totalorder %s25, 1
      %p153 = por %p151, %p152
      %p154 = scmp.ne.s32.totalorder %s145, %s146
      %p155 = scmp.eq.s32.totalorder %s25, 0
      %p156 = por %p154, %p155
      %p157 = scmp.ne.s32.totalorder %s145, %s146
      %p158 = scmp.eq.s32.totalorder %s26, 1
      %p159 = por %p157, %p158
      %p161 = scmp.ne.s32.totalorder %s146, %s160
      %p162 = scmp.eq.s32.totalorder %s26, 0
      %p163 = por %p161, %p162
      %s165 = sadd.s32 %s164, 1
      %p168 = scmp.eq.s32.totalorder %s20, 1
      %p169 = scmp.ne.s32.totalorder %s164, %s166
      %p170 = scmp.eq.s32.totalorder %s20, 0
      %p171 = por %p169, %p170
      %p172 = scmp.ne.s32.totalorder %s164, %s166
      %p173 = scmp.eq.s32.totalorder %s25, 1
      %p174 = por %p172, %p173
      %p175 = scmp.ne.s32.totalorder %s166, %s167
      %p176 = scmp.eq.s32.totalorder %s25, 0
      %p177 = por %p175, %p176
      %p178 = scmp.ne.s32.totalorder %s166, %s167
      %p179 = scmp.eq.s32.totalorder %s26, 1
      %p180 = por %p178, %p179
      %p182 = scmp.ne.s32.totalorder %s167, %s181
      %p183 = scmp.eq.s32.totalorder %s26, 0
      %p184 = por %p182, %p183
      %s186 = sadd.s32 %s185, 1
      %p189 = scmp.eq.s32.totalorder %s20, 1
      %p190 = scmp.ne.s32.totalorder %s185, %s187
      %p191 = scmp.eq.s32.totalorder %s20, 0
      %p192 = por %p190, %p191
      %p193 = scmp.ne.s32.totalorder %s185, %s187
      %p194 = scmp.eq.s32.totalorder %s25, 1
      %p195 = por %p193, %p194
      %p196 = scmp.ne.s32.totalorder %s187, %s188
      %p197 = scmp.eq.s32.totalorder %s25, 0
      %p198 = por %p196, %p197
      %p199 = scmp.ne.s32.totalorder %s187, %s188
      %p200 = scmp.eq.s32.totalorder %s26, 1
      %p201 = por %p199, %p200
      %p203 = scmp.ne.s32.totalorder %s188, %s202
      %p204 = scmp.eq.s32.totalorder %s26, 0
      %p205 = por %p203, %p204
      %s207 = sadd.s32 %s206, 1
      %p210 = scmp.eq.s32.totalorder %s20, 1
      %p211 = scmp.ne.s32.totalorder %s206, %s208
      %p212 = scmp.eq.s32.totalorder %s20, 0
      %p213 = por %p211, %p212
      %p214 = scmp.ne.s32.totalorder %s206, %s208
      %p215 = scmp.eq.s32.totalorder %s25, 1
      %p216 = por %p214, %p215
      %p217 = scmp.ne.s32.totalorder %s208, %s209
      %p218 = scmp.eq.s32.totalorder %s25, 0
      %p219 = por %p217, %p218
      %p220 = scmp.ne.s32.totalorder %s208, %s209
      %p221 = scmp.eq.s32.totalorder %s26, 1
      %p222 = por %p220, %p221
      %p224 = scmp.ne.s32.totalorder %s209, %s223
      %p225 = scmp.eq.s32.totalorder %s26, 0
      %p226 = por %p224, %p225
      %s227 = ssub.s32 %s20, %s27
      %p228 = scmp.eq.s32.totalorder %s227, 0
      %s230 = sadd.s32 %s229, 1
      %s231 = scalar_select %p228, %s229, %s230
      %p234 = pneg %p228
      %p235 = scmp.eq.s32.totalorder %s20, 1
      %p236 = por %p234, %p235
      %p237 = scmp.ne.s32.totalorder %s229, %s232
      %p238 = scmp.eq.s32.totalorder %s20, 0
      %p239 = por %p237, %p238
      %p240 = scmp.ne.s32.totalorder %s229, %s232
      %p241 = scmp.eq.s32.totalorder %s25, 1
      %p242 = por %p240, %p241
      %p243 = scmp.ne.s32.totalorder %s232, %s233
      %p244 = scmp.eq.s32.totalorder %s25, 0
      %p245 = por %p243, %p244
      %p246 = scmp.ne.s32.totalorder %s232, %s233
      %p247 = scmp.eq.s32.totalorder %s26, 1
      %p248 = por %p246, %p247
      %p250 = scmp.ne.s32.totalorder %s233, %s249
      %p251 = scmp.eq.s32.totalorder %s26, 0
      %p252 = por %p250, %p251
      %s253 = ssub.s32 %s20, %s27
      %p254 = scmp.eq.s32.totalorder %s253, 0
      %s256 = sadd.s32 %s255, 1
      %s257 = scalar_select %p254, %s255, %s256
      %p260 = pneg %p254
      %p261 = scmp.eq.s32.totalorder %s20, 1
      %p262 = por %p260, %p261
      %p263 = scmp.ne.s32.totalorder %s255, %s258
      %p264 = scmp.eq.s32.totalorder %s20, 0
      %p265 = por %p263, %p264
      %p266 = scmp.ne.s32.totalorder %s255, %s258
      %p267 = scmp.eq.s32.totalorder %s25, 1
      %p268 = por %p266, %p267
      %p269 = scmp.ne.s32.totalorder %s258, %s259
      %p270 = scmp.eq.s32.totalorder %s25, 0
      %p271 = por %p269, %p270
      %p272 = scmp.ne.s32.totalorder %s258, %s259
      %p273 = scmp.eq.s32.totalorder %s26, 1
      %p274 = por %p272, %p273
      %p276 = scmp.ne.s32.totalorder %s259, %s275
      %p277 = scmp.eq.s32.totalorder %s26, 0
      %p278 = por %p276, %p277
      %s279 = ssub.s32 %s20, %s27
      %p280 = scmp.eq.s32.totalorder %s279, 0
      %s282 = sadd.s32 %s281, 1
      %s283 = scalar_select %p280, %s281, %s282
      %p286 = pneg %p280
      %p287 = scmp.eq.s32.totalorder %s20, 1
      %p288 = por %p286, %p287
      %p289 = scmp.ne.s32.totalorder %s281, %s284
      %p290 = scmp.eq.s32.totalorder %s20, 0
      %p291 = por %p289, %p290
      %p292 = scmp.ne.s32.totalorder %s281, %s284
      %p293 = scmp.eq.s32.totalorder %s25, 1
      %p294 = por %p292, %p293
      %p295 = scmp.ne.s32.totalorder %s284, %s285
      %p296 = scmp.eq.s32.totalorder %s25, 0
      %p297 = por %p295, %p296
      %p298 = scmp.ne.s32.totalorder %s284, %s285
      %p299 = scmp.eq.s32.totalorder %s26, 1
      %p300 = por %p298, %p299
      %p302 = scmp.ne.s32.totalorder %s285, %s301
      %p303 = scmp.eq.s32.totalorder %s26, 0
      %p304 = por %p302, %p303
      %p305 = scmp.le.s32.totalorder 1, %s20
      %p306 = scmp.lt.s32.totalorder %s20, 3
      %p307 = pnand %p305, %p306
      %p308 = pneg %p307
      // Predicated region
      $region9: #{tpu_custom_call.1} parent=5 // pred_check
        _
      $region10: #{tpu_custom_call.1} parent=5 // pred_check_branch
        %310 = sbr.rel (%p307) target = $region12
      $region11: #{tpu_custom_call.1} parent=5 // pred_region
        %s311 = ssub.s32 %s20, 1
        // Predicated region
        $region13: #{tpu_custom_call.1} parent=11 // pred_check
          %p312 = pneg %p93
        $region14: #{tpu_custom_call.1} parent=11 // pred_check_branch
          %314 = sbr.rel (%p312) target = $region16
        $region15: #{tpu_custom_call.1} parent=11 // pred_region
          _
        $region16: #{tpu_custom_call.1} parent=11 // pred_fallthru
          _
        // Predicated region
        $region17: #{tpu_custom_call.1} parent=11 // pred_check
          %p315 = pneg %p114
        $region18: #{tpu_custom_call.1} parent=11 // pred_check_branch
          %317 = sbr.rel (%p315) target = $region20
        $region19: #{tpu_custom_call.1} parent=11 // pred_region
          _
        $region20: #{tpu_custom_call.1} parent=11 // pred_fallthru
          _
        // Predicated region
        $region21: #{tpu_custom_call.1} parent=11 // pred_check
          %p318 = pneg %p135
        $region22: #{tpu_custom_call.1} parent=11 // pred_check_branch
          %320 = sbr.rel (%p318) target = $region24
        $region23: #{tpu_custom_call.1} parent=11 // pred_region
          %322 = vsyncadd [#allocation6], 0
          %s323 = sshll.u32 %s4, 4
          %s324 = int_to_ptr.hbm [resolvable:$true] %s323
          %s325 = sshll.u32 [#allocation5], 4
          %s326 = int_to_ptr.vmem [resolvable:$true] %s325
          %331 = dma.hbm_to_vmem [thread:$0]  %s324, 512, %s326, [#allocation6], 128, 128, 8
        $region24: #{tpu_custom_call.1} parent=11 // pred_fallthru
          _
        // Predicated region
        $region25: #{tpu_custom_call.1} parent=11 // pred_check
          %p332 = pneg %p156
        $region26: #{tpu_custom_call.1} parent=11 // pred_check_branch
          %334 = sbr.rel (%p332) target = $region28
        $region27: #{tpu_custom_call.1} parent=11 // pred_region
          %336 = vsyncadd [#allocation8], 0
          %s337 = sshll.u32 %s5, 4
          %s338 = int_to_ptr.hbm [resolvable:$true] %s337
          %s339 = sshll.u32 [#allocation7], 4
          %s340 = int_to_ptr.vmem [resolvable:$true] %s339
          %345 = dma.hbm_to_vmem [thread:$0]  %s338, 512, %s340, [#allocation8], 128, 128, 8
        $region28: #{tpu_custom_call.1} parent=11 // pred_fallthru
          _
        // Predicated region
        $region29: #{tpu_custom_call.1} parent=11 // pred_check
          %p346 = pneg %p177
        $region30: #{tpu_custom_call.1} parent=11 // pred_check_branch
          %348 = sbr.rel (%p346) target = $region32
        $region31: #{tpu_custom_call.1} parent=11 // pred_region
          %350 = vsyncadd [#allocation8], 0
          %s352 = sshll.u32 %s6, 4
          %s353 = int_to_ptr.hbm [resolvable:$true] %s352
          %s354 = sshll.u32 [#allocation9], 4
          %s355 = int_to_ptr.vmem [resolvable:$true] %s354
          %357 = dma.hbm_to_vmem [thread:$0]  %s353, 16, %s355, [#allocation8]
        $region32: #{tpu_custom_call.1} parent=11 // pred_fallthru
          _
        // Predicated region
        $region33: #{tpu_custom_call.1} parent=11 // pred_check
          %p358 = pneg %p198
        $region34: #{tpu_custom_call.1} parent=11 // pred_check_branch
          %360 = sbr.rel (%p358) target = $region36
        $region35: #{tpu_custom_call.1} parent=11 // pred_region
          _
        $region36: #{tpu_custom_call.1} parent=11 // pred_fallthru
          _
        // Predicated region
        $region37: #{tpu_custom_call.1} parent=11 // pred_check
          %p361 = pneg %p219
        $region38: #{tpu_custom_call.1} parent=11 // pred_check_branch
          %363 = sbr.rel (%p361) target = $region40
        $region39: #{tpu_custom_call.1} parent=11 // pred_region
          %365 = vsyncadd [#allocation11], 0
          %s367 = sshll.u32 %s8, 4
          %s368 = int_to_ptr.hbm [resolvable:$true] %s367
          %s369 = sshll.u32 [#allocation10], 4
          %s370 = int_to_ptr.vmem [resolvable:$true] %s369
          %372 = dma.hbm_to_vmem [thread:$0]  %s368, 16, %s370, [#allocation11]
        $region40: #{tpu_custom_call.1} parent=11 // pred_fallthru
          _
      $region12: #{tpu_custom_call.1} parent=5 // pred_fallthru
        _
      %p373 = scmp.lt.s32.totalorder %s20, 2
      // Predicated region
      $region41: #{tpu_custom_call.1} parent=5 // pred_check
        %p374 = pneg %p373
      $region42: #{tpu_custom_call.1} parent=5 // pred_check_branch
        %376 = sbr.rel (%p374) target = $region44
      $region43: #{tpu_custom_call.1} parent=5 // pred_region
        // Predicated region
        $region45: #{tpu_custom_call.1} parent=43 // pred_check
          %p377 = pneg %p40
        $region46: #{tpu_custom_call.1} parent=43 // pred_check_branch
          %379 = sbr.rel (%p377) target = $region48
        $region47: #{tpu_custom_call.1} parent=43 // pred_region
          %s380 = sand.u32 %s30, 1
          %s381 = sand.u32 %s30, 1
          %s382 = smul.addr %s381, 64
          %s383 = scalar_lea.vmem [#allocation3], %s382
          %s384 = smul.addr %s20, 8
          %s385 = scalar_lea.vmem %s0, %s384
          // Predicated region
          $region49: #{tpu_custom_call.1} parent=47 // pred_check
            _
          $region50: #{tpu_custom_call.1} parent=47 // pred_check_branch
            %387 = sbr.rel (0) target = $region52
          $region51: #{tpu_custom_call.1} parent=47 // pred_region
            // Predicated region
            $region53: #{tpu_custom_call.1} parent=51 // pred_check
              _
            $region54: #{tpu_custom_call.1} parent=51 // pred_check_branch
              %389 = sbr.rel (0) target = $region56
            $region55: #{tpu_custom_call.1} parent=51 // pred_region
              // Predicated region
              $region68: #{tpu_custom_call.1} parent=55 // pred_check
                _
              $region69: #{tpu_custom_call.1} parent=55 // pred_check_branch
                %419 = sbr.rel (0) target = $region71
              $region70: #{tpu_custom_call.1} parent=55 // pred_region
                loop: start=0, step=1, limit=1
                $region72: #{tpu_custom_call.1} parent=70 // loop_pre_header
                  _
                $region73: #{tpu_custom_call.1} parent=70 // loop_header
                  %s421 = sphi 0, %s425
                  %p422 = scmp.ge.s32.totalorder %s421, 1
                  %s426 = sphi %s385, %s385
                  %s427 = sphi %s383, %s383
                $region74: #{tpu_custom_call.1} parent=70 // loop_header_branch
                  %424 = sbr.rel (%p422) target = $region78
                $region75: #{tpu_custom_call.1} parent=70 // loop_body
                  %v428 = vld [vmem:[%s426] sm:$0xff]
                  %429 = vst [vmem:[%s427] sm:$0xff] %v428
                  %v430 = vld [vmem:[%s426 + $0x10] sm:$0xff]
                  %431 = vst [vmem:[%s427 + $0x8] sm:$0xff] %v430
                  %v432 = vld [vmem:[%s426 + $0x20] sm:$0xff]
                  %433 = vst [vmem:[%s427 + $0x10] sm:$0xff] %v432
                  %v434 = vld [vmem:[%s426 + $0x30] sm:$0xff]
                  %435 = vst [vmem:[%s427 + $0x18] sm:$0xff] %v434
                  %v436 = vld [vmem:[%s426 + $0x40] sm:$0xff]
                  %437 = vst [vmem:[%s427 + $0x20] sm:$0xff] %v436
                  %v438 = vld [vmem:[%s426 + $0x50] sm:$0xff]
                  %439 = vst [vmem:[%s427 + $0x28] sm:$0xff] %v438
                  %v440 = vld [vmem:[%s426 + $0x60] sm:$0xff]
                  %441 = vst [vmem:[%s427 + $0x30] sm:$0xff] %v440
                  %v442 = vld [vmem:[%s426 + $0x70] sm:$0xff]
                  %443 = vst [vmem:[%s427 + $0x38] sm:$0xff] %v442
                $region76: #{tpu_custom_call.1} parent=70 // loop_footer
                  %s425 = sadd.s32 1, %s421
                $region77: #{tpu_custom_call.1} parent=70 // loop_footer_branch
                  %420 = sbr.rel target = $region73
                $region78: #{tpu_custom_call.1} parent=70 // loop_exit
                  _
              $region71: #{tpu_custom_call.1} parent=55 // pred_fallthru
                _
              // Predicated region
              $region79: #{tpu_custom_call.1} parent=55 // pred_check
                _
              $region80: #{tpu_custom_call.1} parent=55 // pred_check_branch
                %445 = sbr.rel target = $region82
              $region81: #{tpu_custom_call.1} parent=55 // pred_region
                _
              $region82: #{tpu_custom_call.1} parent=55 // pred_fallthru
                _
            $region56: #{tpu_custom_call.1} parent=51 // pred_fallthru
              _
            // Predicated region
            $region57: #{tpu_custom_call.1} parent=51 // pred_check
              _
            $region58: #{tpu_custom_call.1} parent=51 // pred_check_branch
              %391 = sbr.rel target = $region60
            $region59: #{tpu_custom_call.1} parent=51 // pred_region
              %s393 = ssub.s32 256, 1
              loop: start=0, step=1, limit=1
              $region61: #{tpu_custom_call.1} parent=59 // loop_pre_header
                _
              $region62: #{tpu_custom_call.1} parent=59 // loop_header
                %s395 = sphi 0, %s399
                %p396 = scmp.ge.s32.totalorder %s395, 1
                %s400 = sphi %s385, %s385
                %s401 = sphi %s383, %s383
              $region63: #{tpu_custom_call.1} parent=59 // loop_header_branch
                %398 = sbr.rel (%p396) target = $region67
              $region64: #{tpu_custom_call.1} parent=59 // loop_body
                %v402 = vld [vmem:[%s400] sm:%s393]
                %403 = vst [vmem:[%s401] sm:%s393] %v402
                %v404 = vld [vmem:[%s400 + $0x10] sm:%s393]
                %405 = vst [vmem:[%s401 + $0x8] sm:%s393] %v404
                %v406 = vld [vmem:[%s400 + $0x20] sm:%s393]
                %407 = vst [vmem:[%s401 + $0x10] sm:%s393] %v406
                %v408 = vld [vmem:[%s400 + $0x30] sm:%s393]
                %409 = vst [vmem:[%s401 + $0x18] sm:%s393] %v408
                %v410 = vld [vmem:[%s400 + $0x40] sm:%s393]
                %411 = vst [vmem:[%s401 + $0x20] sm:%s393] %v410
                %v412 = vld [vmem:[%s400 + $0x50] sm:%s393]
                %413 = vst [vmem:[%s401 + $0x28] sm:%s393] %v412
                %v414 = vld [vmem:[%s400 + $0x60] sm:%s393]
                %415 = vst [vmem:[%s401 + $0x30] sm:%s393] %v414
                %v416 = vld [vmem:[%s400 + $0x70] sm:%s393]
                %417 = vst [vmem:[%s401 + $0x38] sm:%s393] %v416
              $region65: #{tpu_custom_call.1} parent=59 // loop_footer
                %s399 = sadd.s32 1, %s395
              $region66: #{tpu_custom_call.1} parent=59 // loop_footer_branch
                %394 = sbr.rel target = $region62
              $region67: #{tpu_custom_call.1} parent=59 // loop_exit
                _
            $region60: #{tpu_custom_call.1} parent=51 // pred_fallthru
              _
          $region52: #{tpu_custom_call.1} parent=47 // pred_fallthru
            _
          %446 = vnop
        $region48: #{tpu_custom_call.1} parent=43 // pred_fallthru
          _
        // Predicated region
        $region83: #{tpu_custom_call.1} parent=43 // pred_check
          %p447 = pneg %p66
        $region84: #{tpu_custom_call.1} parent=43 // pred_check_branch
          %449 = sbr.rel (%p447) target = $region86
        $region85: #{tpu_custom_call.1} parent=43 // pred_region
          %s450 = sand.u32 %s56, 1
          %s451 = sand.u32 %s56, 1
          %s452 = smul.addr %s451, 64
          %s453 = scalar_lea.vmem [#allocation4], %s452
          %s454 = smul.addr %s20, 8
          %s455 = scalar_lea.vmem %s1, %s454
          // Predicated region
          $region87: #{tpu_custom_call.1} parent=85 // pred_check
            _
          $region88: #{tpu_custom_call.1} parent=85 // pred_check_branch
            %457 = sbr.rel (0) target = $region90
          $region89: #{tpu_custom_call.1} parent=85 // pred_region
            // Predicated region
            $region91: #{tpu_custom_call.1} parent=89 // pred_check
              _
            $region92: #{tpu_custom_call.1} parent=89 // pred_check_branch
              %459 = sbr.rel (0) target = $region94
            $region93: #{tpu_custom_call.1} parent=89 // pred_region
              // Predicated region
              $region106: #{tpu_custom_call.1} parent=93 // pred_check
                _
              $region107: #{tpu_custom_call.1} parent=93 // pred_check_branch
                %489 = sbr.rel (0) target = $region109
              $region108: #{tpu_custom_call.1} parent=93 // pred_region
                loop: start=0, step=1, limit=1
                $region110: #{tpu_custom_call.1} parent=108 // loop_pre_header
                  _
                $region111: #{tpu_custom_call.1} parent=108 // loop_header
                  %s491 = sphi 0, %s495
                  %p492 = scmp.ge.s32.totalorder %s491, 1
                  %s496 = sphi %s455, %s455
                  %s497 = sphi %s453, %s453
                $region112: #{tpu_custom_call.1} parent=108 // loop_header_branch
                  %494 = sbr.rel (%p492) target = $region116
                $region113: #{tpu_custom_call.1} parent=108 // loop_body
                  %v498 = vld [vmem:[%s496] sm:$0xff]
                  %499 = vst [vmem:[%s497] sm:$0xff] %v498
                  %v500 = vld [vmem:[%s496 + $0x10] sm:$0xff]
                  %501 = vst [vmem:[%s497 + $0x8] sm:$0xff] %v500
                  %v502 = vld [vmem:[%s496 + $0x20] sm:$0xff]
                  %503 = vst [vmem:[%s497 + $0x10] sm:$0xff] %v502
                  %v504 = vld [vmem:[%s496 + $0x30] sm:$0xff]
                  %505 = vst [vmem:[%s497 + $0x18] sm:$0xff] %v504
                  %v506 = vld [vmem:[%s496 + $0x40] sm:$0xff]
                  %507 = vst [vmem:[%s497 + $0x20] sm:$0xff] %v506
                  %v508 = vld [vmem:[%s496 + $0x50] sm:$0xff]
                  %509 = vst [vmem:[%s497 + $0x28] sm:$0xff] %v508
                  %v510 = vld [vmem:[%s496 + $0x60] sm:$0xff]
                  %511 = vst [vmem:[%s497 + $0x30] sm:$0xff] %v510
                  %v512 = vld [vmem:[%s496 + $0x70] sm:$0xff]
                  %513 = vst [vmem:[%s497 + $0x38] sm:$0xff] %v512
                $region114: #{tpu_custom_call.1} parent=108 // loop_footer
                  %s495 = sadd.s32 1, %s491
                $region115: #{tpu_custom_call.1} parent=108 // loop_footer_branch
                  %490 = sbr.rel target = $region111
                $region116: #{tpu_custom_call.1} parent=108 // loop_exit
                  _
              $region109: #{tpu_custom_call.1} parent=93 // pred_fallthru
                _
              // Predicated region
              $region117: #{tpu_custom_call.1} parent=93 // pred_check
                _
              $region118: #{tpu_custom_call.1} parent=93 // pred_check_branch
                %515 = sbr.rel target = $region120
              $region119: #{tpu_custom_call.1} parent=93 // pred_region
                _
              $region120: #{tpu_custom_call.1} parent=93 // pred_fallthru
                _
            $region94: #{tpu_custom_call.1} parent=89 // pred_fallthru
              _
            // Predicated region
            $region95: #{tpu_custom_call.1} parent=89 // pred_check
              _
            $region96: #{tpu_custom_call.1} parent=89 // pred_check_branch
              %461 = sbr.rel target = $region98
            $region97: #{tpu_custom_call.1} parent=89 // pred_region
              %s463 = ssub.s32 256, 1
              loop: start=0, step=1, limit=1
              $region99: #{tpu_custom_call.1} parent=97 // loop_pre_header
                _
              $region100: #{tpu_custom_call.1} parent=97 // loop_header
                %s465 = sphi 0, %s469
                %p466 = scmp.ge.s32.totalorder %s465, 1
                %s470 = sphi %s455, %s455
                %s471 = sphi %s453, %s453
              $region101: #{tpu_custom_call.1} parent=97 // loop_header_branch
                %468 = sbr.rel (%p466) target = $region105
              $region102: #{tpu_custom_call.1} parent=97 // loop_body
                %v472 = vld [vmem:[%s470] sm:%s463]
                %473 = vst [vmem:[%s471] sm:%s463] %v472
                %v474 = vld [vmem:[%s470 + $0x10] sm:%s463]
                %475 = vst [vmem:[%s471 + $0x8] sm:%s463] %v474
                %v476 = vld [vmem:[%s470 + $0x20] sm:%s463]
                %477 = vst [vmem:[%s471 + $0x10] sm:%s463] %v476
                %v478 = vld [vmem:[%s470 + $0x30] sm:%s463]
                %479 = vst [vmem:[%s471 + $0x18] sm:%s463] %v478
                %v480 = vld [vmem:[%s470 + $0x40] sm:%s463]
                %481 = vst [vmem:[%s471 + $0x20] sm:%s463] %v480
                %v482 = vld [vmem:[%s470 + $0x50] sm:%s463]
                %483 = vst [vmem:[%s471 + $0x28] sm:%s463] %v482
                %v484 = vld [vmem:[%s470 + $0x60] sm:%s463]
                %485 = vst [vmem:[%s471 + $0x30] sm:%s463] %v484
                %v486 = vld [vmem:[%s470 + $0x70] sm:%s463]
                %487 = vst [vmem:[%s471 + $0x38] sm:%s463] %v486
              $region103: #{tpu_custom_call.1} parent=97 // loop_footer
                %s469 = sadd.s32 1, %s465
              $region104: #{tpu_custom_call.1} parent=97 // loop_footer_branch
                %464 = sbr.rel target = $region100
              $region105: #{tpu_custom_call.1} parent=97 // loop_exit
                _
            $region98: #{tpu_custom_call.1} parent=89 // pred_fallthru
              _
          $region90: #{tpu_custom_call.1} parent=85 // pred_fallthru
            _
          %516 = vnop
        $region86: #{tpu_custom_call.1} parent=43 // pred_fallthru
          _
        // Predicated region
        $region121: #{tpu_custom_call.1} parent=43 // pred_check
          %p517 = pneg %p239
        $region122: #{tpu_custom_call.1} parent=43 // pred_check_branch
          %519 = sbr.rel (%p517) target = $region124
        $region123: #{tpu_custom_call.1} parent=43 // pred_region
          %s520 = sand.u32 %s20, 1
          %s521 = scalar_lea.sflag [#allocation6], %s520
          %s522 = sand.u32 %s229, 1
          %s523 = smul.addr %s522, 8
          %s524 = scalar_lea.vmem [#allocation12], %s523
          %526 = vsyncadd %s521, 0
          %s527 = smul.addr %s20, 8
          %s528 = scalar_lea.hbm %s9, %s527
          %s530 = sshll.u32 %s528, 4
          %s531 = int_to_ptr.hbm [resolvable:$true] %s530
          %s532 = sshll.u32 %s524, 4
          %s533 = int_to_ptr.vmem [resolvable:$true] %s532
          %535 = dma.hbm_to_vmem [thread:$0]  %s531, 128, %s533, %s521
        $region124: #{tpu_custom_call.1} parent=43 // pred_fallthru
          _
        // Predicated region
        $region125: #{tpu_custom_call.1} parent=43 // pred_check
          %p536 = pneg %p265
        $region126: #{tpu_custom_call.1} parent=43 // pred_check_branch
          %538 = sbr.rel (%p536) target = $region128
        $region127: #{tpu_custom_call.1} parent=43 // pred_region
          %p539 = scmp.lt.s32.totalorder %s20, 1
          %s540 = scalar_select %p539, %s20, 1
          %s541 = smul.addr %s540, 8
          %s542 = scalar_lea.vmem %s10, %s541
        $region128: #{tpu_custom_call.1} parent=43 // pred_fallthru
          _
      $region44: #{tpu_custom_call.1} parent=5 // pred_fallthru
        _
      %p543 = scmp.le.s32.totalorder 1, %s20
      %p544 = scmp.lt.s32.totalorder %s20, 3
      %p545 = pnand %p543, %p544
      %p546 = pneg %p545
      // Predicated region
      $region129: #{tpu_custom_call.1} parent=5 // pred_check
        _
      $region130: #{tpu_custom_call.1} parent=5 // pred_check_branch
        %548 = sbr.rel (%p545) target = $region132
      $region131: #{tpu_custom_call.1} parent=5 // pred_region
        %s549 = ssub.s32 %s20, 1
        %s550 = sand.u32 %s33, 1
        %s551 = sand.u32 %s33, 1
        %s552 = smul.addr %s551, 64
        %s553 = scalar_lea.vmem [#allocation3], %s552
        // Predicated region
        $region133: #{tpu_custom_call.1} parent=131 // pred_check
          %p554 = pneg %p46
        $region134: #{tpu_custom_call.1} parent=131 // pred_check_branch
          %556 = sbr.rel (%p554) target = $region136
        $region135: #{tpu_custom_call.1} parent=131 // pred_region
          _
        $region136: #{tpu_custom_call.1} parent=131 // pred_fallthru
          _
        %s557 = sand.u32 %s59, 1
        %s558 = sand.u32 %s59, 1
        %s559 = smul.addr %s558, 64
        %s560 = scalar_lea.vmem [#allocation4], %s559
        // Predicated region
        $region137: #{tpu_custom_call.1} parent=131 // pred_check
          %p561 = pneg %p72
        $region138: #{tpu_custom_call.1} parent=131 // pred_check_branch
          %563 = sbr.rel (%p561) target = $region140
        $region139: #{tpu_custom_call.1} parent=131 // pred_region
          _
        $region140: #{tpu_custom_call.1} parent=131 // pred_fallthru
          _
        // Predicated region
        $region141: #{tpu_custom_call.1} parent=131 // pred_check
          %p564 = pneg %p135
        $region142: #{tpu_custom_call.1} parent=131 // pred_check_branch
          %566 = sbr.rel (%p564) target = $region144
        $region143: #{tpu_custom_call.1} parent=131 // pred_region
          %568 = dma.done [#allocation6], 512
        $region144: #{tpu_custom_call.1} parent=131 // pred_fallthru
          _
        // Predicated region
        $region145: #{tpu_custom_call.1} parent=131 // pred_check
          %p569 = pneg %p156
        $region146: #{tpu_custom_call.1} parent=131 // pred_check_branch
          %571 = sbr.rel (%p569) target = $region148
        $region147: #{tpu_custom_call.1} parent=131 // pred_region
          %573 = dma.done [#allocation8], 512
        $region148: #{tpu_custom_call.1} parent=131 // pred_fallthru
          _
        // Predicated region
        $region149: #{tpu_custom_call.1} parent=131 // pred_check
          %p574 = pneg %p177
        $region150: #{tpu_custom_call.1} parent=131 // pred_check_branch
          %576 = sbr.rel (%p574) target = $region152
        $region151: #{tpu_custom_call.1} parent=131 // pred_region
          %578 = dma.done [#allocation8], 16
        $region152: #{tpu_custom_call.1} parent=131 // pred_fallthru
          _
        // Predicated region
        $region153: #{tpu_custom_call.1} parent=131 // pred_check
          %p579 = pneg %p219
        $region154: #{tpu_custom_call.1} parent=131 // pred_check_branch
          %581 = sbr.rel (%p579) target = $region156
        $region155: #{tpu_custom_call.1} parent=131 // pred_region
          %583 = dma.done [#allocation11], 16
        $region156: #{tpu_custom_call.1} parent=131 // pred_fallthru
          _
        %s584 = sand.u32 %s25, 1
        %s585 = scalar_lea.sflag [#allocation6], %s584
        %s586 = sand.u32 %s232, 1
        %s587 = smul.addr %s586, 8
        %s588 = scalar_lea.vmem [#allocation12], %s587
        // Predicated region
        $region157: #{tpu_custom_call.1} parent=131 // pred_check
          %p589 = pneg %p245
        $region158: #{tpu_custom_call.1} parent=131 // pred_check_branch
          %591 = sbr.rel (%p589) target = $region160
        $region159: #{tpu_custom_call.1} parent=131 // pred_region
          %593 = dma.done %s585, 128
        $region160: #{tpu_custom_call.1} parent=131 // pred_fallthru
          _
        %s594 = sand.u32 %s33, 1
        %s595 = sand.u32 %s33, 1
        %s596 = smul.addr %s595, 64
        %s597 = scalar_lea.vmem [#allocation3], %s596
        %p598 = pneg %p46
        %p599 = pneg %p43
        %s600 = sand.u32 %s59, 1
        %s601 = sand.u32 %s59, 1
        %s602 = smul.addr %s601, 64
        %s603 = scalar_lea.vmem [#allocation4], %s602
        %p604 = pneg %p72
        %p605 = pneg %p69
        %p606 = pneg %p93
        %p607 = pneg %p90
        %p608 = pneg %p114
        %p609 = pneg %p111
        %p610 = pneg %p135
        %p611 = pneg %p132
        %p612 = pneg %p156
        %p613 = pneg %p153
        %p614 = pneg %p177
        %p615 = pneg %p174
        %p616 = pneg %p198
        %p617 = pneg %p195
        %p618 = pneg %p219
        %p619 = pneg %p216
        %s620 = sand.u32 %s25, 1
        %s621 = scalar_lea.sflag [#allocation6], %s620
        %s622 = sand.u32 %s232, 1
        %s623 = smul.addr %s622, 8
        %s624 = scalar_lea.vmem [#allocation12], %s623
        %p625 = pneg %p245
        %p626 = pneg %p242
        %p627 = scmp.lt.s32.totalorder %s25, 1
        %s628 = scalar_select %p627, %s25, 1
        %s629 = smul.addr %s628, 8
        %s630 = scalar_lea.vmem %s10, %s629
        %p631 = pneg %p271
        %p632 = pneg %p268
        %p633 = pneg %p297
        %p634 = pneg %p294
        %p635 = scmp.lt.s32.totalorder %s25, 1
        %s636 = scalar_select %p635, %s25, 1
        %s637 = smul.addr %s636, 8
        %s638 = scalar_lea.vmem %s11, %s637
        %p639 = scmp.lt.s32.totalorder %s25, 1
        %s640 = scalar_select %p639, %s25, 1
        %s641 = smul.addr %s640, 8
        %s642 = scalar_lea.vmem %s10, %s641
        %p643 = scmp.lt.s32.totalorder %s25, 1
        %s644 = scalar_select %p643, %s25, 1
        %s645 = smul.addr %s644, 8
        %s646 = scalar_lea.vmem %s11, %s645
        %v647 = vld [vmem:[%s553] sm:$0xff]
        %v648 = vld [vmem:[%s553 + $0x8] sm:$0xff]
        %v649 = vld [vmem:[%s553 + $0x10] sm:$0xff]
        %v650 = vld [vmem:[%s553 + $0x18] sm:$0xff]
        %v651 = vld [vmem:[%s553 + $0x20] sm:$0xff]
        %v652 = vld [vmem:[%s553 + $0x28] sm:$0xff]
        %v653 = vld [vmem:[%s553 + $0x30] sm:$0xff]
        %v654 = vld [vmem:[%s553 + $0x38] sm:$0xff]
        %v655 = vld [vmem:[%s2] sm:$0xff]
        %v656 = vld [vmem:[%s2 + $0x8] sm:$0xff]
        %v657 = vld [vmem:[%s2 + $0x10] sm:$0xff]
        %v658 = vld [vmem:[%s2 + $0x18] sm:$0xff]
        %v659 = vld [vmem:[%s3] sm:$0x1]
        %v661 = vperm.slane %v659, 0
        %vm663 = vcmask 261120
        %v665 = vsel %vm663, %v647, 0
        %v668 = vsel %vm663, %v648, 0
        %v671 = vsel %vm663, %v649, 0
        %v674 = vsel %vm663, %v650, 0
        %v677 = vsel %vm663, %v651, 0
        %v680 = vsel %vm663, %v652, 0
        %v683 = vsel %vm663, %v653, 0
        %v686 = vsel %vm663, %v654, 0
        %688 = vmatpush.msra.mxu0 0.0
        %689 = vmatpush.msra.mxu0 0.0
        %690 = vmatpush.msra.mxu0 0.0
        %691 = vmatpush.msra.mxu0 0.0
        %692 = vmatpush.msra.mxu0 0.0
        %693 = vmatpush.msra.mxu0 0.0
        %694 = vmatpush.msra.mxu0 0.0
        %695 = vmatpush.msra.mxu0 0.0
        %696 = vmatpush.msra.mxu0 0.0
        %697 = vmatpush.msra.mxu0 0.0
        %698 = vmatpush.msra.mxu0 0.0
        %699 = vmatpush.msra.mxu0 0.0
        %700 = vmatpush.msra.mxu0 %v658
        %701 = vmatpush.msra.mxu0 %v657
        %702 = vmatpush.msra.mxu0 %v656
        %703 = vmatpush.msra.mxu0 %v655
        %704 = vmatmul.f32.gmra.mxu0 %v665
        %v705 = vpop.f32.mrf.mxu0
        %v706 = vadd.f32 %v661, %v705
        %707 = vmatmul.f32.gmra.mxu0 %v668
        %v708 = vpop.f32.mrf.mxu0
        %v709 = vadd.f32 %v661, %v708
        %710 = vmatmul.f32.gmra.mxu0 %v671
        %v711 = vpop.f32.mrf.mxu0
        %v712 = vadd.f32 %v661, %v711
        %713 = vmatmul.f32.gmra.mxu0 %v674
        %v714 = vpop.f32.mrf.mxu0
        %v715 = vadd.f32 %v661, %v714
        %716 = vmatmul.f32.gmra.mxu0 %v677
        %v717 = vpop.f32.mrf.mxu0
        %v718 = vadd.f32 %v661, %v717
        %719 = vmatmul.f32.gmra.mxu0 %v680
        %v720 = vpop.f32.mrf.mxu0
        %v721 = vadd.f32 %v661, %v720
        %722 = vmatmul.f32.gmra.mxu0 %v683
        %v723 = vpop.f32.mrf.mxu0
        %v724 = vadd.f32 %v661, %v723
        %725 = vmatmul.f32.gmra.mxu0 %v686
        %v726 = vpop.f32.mrf.mxu0
        %v727 = vadd.f32 %v661, %v726
        %728 = vdwg.mxu0
        %729 = vst [vmem:[#allocation2] sm:$0xff] %v706
        %730 = vst [vmem:[#allocation2 + $0x8] sm:$0xff] %v709
        %731 = vst [vmem:[#allocation2 + $0x10] sm:$0xff] %v712
        %732 = vst [vmem:[#allocation2 + $0x18] sm:$0xff] %v715
        %733 = vst [vmem:[#allocation2 + $0x20] sm:$0xff] %v718
        %734 = vst [vmem:[#allocation2 + $0x28] sm:$0xff] %v721
        %735 = vst [vmem:[#allocation2 + $0x30] sm:$0xff] %v724
        %736 = vst [vmem:[#allocation2 + $0x38] sm:$0xff] %v727
        %v737 = vld [vmem:[#allocation5] sm:$0xff]
        %v738 = vld [vmem:[#allocation5 + $0x8] sm:$0xff]
        %v739 = vld [vmem:[#allocation5 + $0x10] sm:$0xff]
        %v740 = vld [vmem:[#allocation5 + $0x18] sm:$0xff]
        %v741 = vlaneseq
        %v742 = vand.u32 %v741, 127
        %vm743 = vcmp.ge.s32.totalorder %v742, 64
        %vm744 = vcmp.lt.s32.totalorder %v742, 96
        %vm745 = vmand %vm743, %vm744
        %v746 = vld [vmem:[%s588] sm:$0xff]
        %v747 = vld [vmem:[%s642] sm:$0xff]
        %v748 = vld [vmem:[#allocation2] sm:$0xff]
        %v750 = vsel %vm663, %v746, 0
        %752 = vmatpush.msra.mxu0 0.0
        %753 = vmatpush.msra.mxu0 0.0
        %754 = vmatpush.msra.mxu0 0.0
        %755 = vmatpush.msra.mxu0 0.0
        %756 = vmatpush.msra.mxu0 0.0
        %757 = vmatpush.msra.mxu0 0.0
        %758 = vmatpush.msra.mxu0 0.0
        %759 = vmatpush.msra.mxu0 0.0
        %760 = vmatpush.msra.mxu0 0.0
        %761 = vmatpush.msra.mxu0 0.0
        %762 = vmatpush.msra.mxu0 0.0
        %763 = vmatpush.msra.mxu0 0.0
        %764 = vmatpush.msra.mxu0 %v740
        %765 = vmatpush.msra.mxu0 %v739
        %766 = vmatpush.msra.mxu0 %v738
        %767 = vmatpush.msra.mxu0 %v737
        %768 = vmatmul.f32.gmra.mxu0 %v750
        %v769 = vpop.f32.mrf.mxu0
        %v770 = vadd.f32 0.0, %v769
        %771 = vdwg.mxu0
        %v772 = vadd.f32 %v748, %v770
        %v773 = vtanh.pop %v772
        %v774 = vxor.u32 %v772, 2147483648
        %v775 = vmul.f32 %v774, 1.442695
        %v776 = vpow.pop %v775
        %v777 = vadd.f32 %v776, 1.0
        %v778 = vrcp.pop %v777
        %v779 = vmul.f32 %v777, %v778
        %v780 = vsub.f32 1.0, %v779
        %v781 = vmul.f32 %v778, %v780
        %v782 = vadd.f32 %v778, %v781
        %vm783 = vweird.f32 %v777
        %vm784 = vweird.f32 %v778
        %vm785 = vmor %vm783, %vm784
        %v786 = vsel %vm785, %v778, %v782
        %v787 = vand.u32 2147483647, %v777
        %vm788 = vcmp.eq.f32.partialorder %v787, 8.507059e+37
        %v789 = vand.u32 %v777, 2147483648
        %v790 = vor.u32 1.1754944e-38, %v789
        %v791 = vsel %vm788, %v790, %v786
        %v792 = vmul.f32 1.0, %v791
        %v793 = vsel %vm745, %v773, %v792
        %795 = vrot.lane.b32.xlu0 %v747, 32
        %v796 = vpop.permute.xlu0 %795
        %v798 = vmul.f32 %v793, %v796
        %800 = vrot.lane.b32.xlu0 %v793, 64
        %v801 = vpop.permute.xlu0 %800
        %v803 = vmul.f32 %v793, %v801
        %805 = vrot.lane.b32.xlu0 %v803, 32
        %v806 = vpop.permute.xlu0 %805
        %v808 = vadd.f32 %v798, %v806
        %v809 = vtanh.pop %v808
        %811 = vrot.lane.b32.xlu0 %v809, 64
        %v812 = vpop.permute.xlu0 %811
        %v814 = vmul.f32 %v793, %v812
        %v815 = vld [vmem:[%s560] sm:$0xff]
        %816 = vrot.lane.b32.xlu0 %v746, 96
        %v817 = vpop.permute.xlu0 %816
        %v819 = vsub.f32 %v814, %v817
        %821 = vset.pattern.permute.xlu0 0
        %822 = vperm.xlu0 %821, %v815
        %v823 = vpop.permute.xlu0 %822
        %v825 = vmul.f32 %v823, %v819
        %827 = vrot.lane.b32.xlu0 %v825, 32
        %v828 = vpop.permute.xlu0 %827
        %v830 = vadd.f32 %v746, %v828
        %v831 = vsub.f32 %v808, %v796
        %v832 = vmul.f32 %v823, %v831
        %834 = vrot.lane.b32.xlu0 %v832, 96
        %v835 = vpop.permute.xlu0 %834
        %v837 = vadd.f32 %v747, %v835
        %s838 = scalar_lea.vmem [#allocation2], 8
        %v839 = vld [vmem:[%s838] sm:$0xff]
        %v841 = vsel %vm663, %v830, 0
        %843 = vmatpush.msra.mxu0 0.0
        %844 = vmatpush.msra.mxu0 0.0
        %845 = vmatpush.msra.mxu0 0.0
        %846 = vmatpush.msra.mxu0 0.0
        %847 = vmatpush.msra.mxu0 0.0
        %848 = vmatpush.msra.mxu0 0.0
        %849 = vmatpush.msra.mxu0 0.0
        %850 = vmatpush.msra.mxu0 0.0
        %851 = vmatpush.msra.mxu0 0.0
        %852 = vmatpush.msra.mxu0 0.0
        %853 = vmatpush.msra.mxu0 0.0
        %854 = vmatpush.msra.mxu0 0.0
        %855 = vmatpush.msra.mxu0 %v740
        %856 = vmatpush.msra.mxu0 %v739
        %857 = vmatpush.msra.mxu0 %v738
        %858 = vmatpush.msra.mxu0 %v737
        %859 = vmatmul.f32.gmra.mxu0 %v841
        %v860 = vpop.f32.mrf.mxu0
        %v861 = vadd.f32 0.0, %v860
        %862 = vdwg.mxu0
        %v863 = vadd.f32 %v839, %v861
        %v864 = vtanh.pop %v863
        %v865 = vxor.u32 %v863, 2147483648
        %v866 = vmul.f32 %v865, 1.442695
        %v867 = vpow.pop %v866
        %v868 = vadd.f32 %v867, 1.0
        %v869 = vrcp.pop %v868
        %v870 = vmul.f32 %v868, %v869
        %v871 = vsub.f32 1.0, %v870
        %v872 = vmul.f32 %v869, %v871
        %v873 = vadd.f32 %v869, %v872
        %vm874 = vweird.f32 %v868
        %vm875 = vweird.f32 %v869
        %vm876 = vmor %vm874, %vm875
        %v877 = vsel %vm876, %v869, %v873
        %v878 = vand.u32 2147483647, %v868
        %vm879 = vcmp.eq.f32.partialorder %v878, 8.507059e+37
        %v880 = vand.u32 %v868, 2147483648
        %v881 = vor.u32 1.1754944e-38, %v880
        %v882 = vsel %vm879, %v881, %v877
        %v883 = vmul.f32 1.0, %v882
        %v884 = vsel %vm745, %v864, %v883
        %886 = vrot.lane.b32.xlu0 %v837, 32
        %v887 = vpop.permute.xlu0 %886
        %v889 = vmul.f32 %v884, %v887
        %891 = vrot.lane.b32.xlu0 %v884, 64
        %v892 = vpop.permute.xlu0 %891
        %v894 = vmul.f32 %v884, %v892
        %896 = vrot.lane.b32.xlu0 %v894, 32
        %v897 = vpop.permute.xlu0 %896
        %v899 = vadd.f32 %v889, %v897
        %v900 = vtanh.pop %v899
        %902 = vrot.lane.b32.xlu0 %v900, 64
        %v903 = vpop.permute.xlu0 %902
        %v905 = vmul.f32 %v884, %v903
        %s906 = scalar_lea.vmem %s560, 8 [#allocation4]
        %v907 = vld [vmem:[%s906] sm:$0xff]
        %908 = vrot.lane.b32.xlu0 %v830, 96
        %v909 = vpop.permute.xlu0 %908
        %v911 = vsub.f32 %v905, %v909
        %913 = vset.pattern.permute.xlu0 0
        %914 = vperm.xlu0 %913, %v907
        %v915 = vpop.permute.xlu0 %914
        %v917 = vmul.f32 %v915, %v911
        %919 = vrot.lane.b32.xlu0 %v917, 32
        %v920 = vpop.permute.xlu0 %919
        %v922 = vadd.f32 %v830, %v920
        %v923 = vsub.f32 %v899, %v887
        %v924 = vmul.f32 %v915, %v923
        %926 = vrot.lane.b32.xlu0 %v924, 96
        %v927 = vpop.permute.xlu0 %926
        %v929 = vadd.f32 %v837, %v927
        %s930 = scalar_lea.vmem [#allocation2], 16
        %v931 = vld [vmem:[%s930] sm:$0xff]
        %v933 = vsel %vm663, %v922, 0
        %935 = vmatpush.msra.mxu0 0.0
        %936 = vmatpush.msra.mxu0 0.0
        %937 = vmatpush.msra.mxu0 0.0
        %938 = vmatpush.msra.mxu0 0.0
        %939 = vmatpush.msra.mxu0 0.0
        %940 = vmatpush.msra.mxu0 0.0
        %941 = vmatpush.msra.mxu0 0.0
        %942 = vmatpush.msra.mxu0 0.0
        %943 = vmatpush.msra.mxu0 0.0
        %944 = vmatpush.msra.mxu0 0.0
        %945 = vmatpush.msra.mxu0 0.0
        %946 = vmatpush.msra.mxu0 0.0
        %947 = vmatpush.msra.mxu0 %v740
        %948 = vmatpush.msra.mxu0 %v739
        %949 = vmatpush.msra.mxu0 %v738
        %950 = vmatpush.msra.mxu0 %v737
        %951 = vmatmul.f32.gmra.mxu0 %v933
        %v952 = vpop.f32.mrf.mxu0
        %v953 = vadd.f32 0.0, %v952
        %954 = vdwg.mxu0
        %v955 = vadd.f32 %v931, %v953
        %v956 = vtanh.pop %v955
        %v957 = vxor.u32 %v955, 2147483648
        %v958 = vmul.f32 %v957, 1.442695
        %v959 = vpow.pop %v958
        %v960 = vadd.f32 %v959, 1.0
        %v961 = vrcp.pop %v960
        %v962 = vmul.f32 %v960, %v961
        %v963 = vsub.f32 1.0, %v962
        %v964 = vmul.f32 %v961, %v963
        %v965 = vadd.f32 %v961, %v964
        %vm966 = vweird.f32 %v960
        %vm967 = vweird.f32 %v961
        %vm968 = vmor %vm966, %vm967
        %v969 = vsel %vm968, %v961, %v965
        %v970 = vand.u32 2147483647, %v960
        %vm971 = vcmp.eq.f32.partialorder %v970, 8.507059e+37
        %v972 = vand.u32 %v960, 2147483648
        %v973 = vor.u32 1.1754944e-38, %v972
        %v974 = vsel %vm971, %v973, %v969
        %v975 = vmul.f32 1.0, %v974
        %v976 = vsel %vm745, %v956, %v975
        %978 = vrot.lane.b32.xlu0 %v929, 32
        %v979 = vpop.permute.xlu0 %978
        %v981 = vmul.f32 %v976, %v979
        %983 = vrot.lane.b32.xlu0 %v976, 64
        %v984 = vpop.permute.xlu0 %983
        %v986 = vmul.f32 %v976, %v984
        %988 = vrot.lane.b32.xlu0 %v986, 32
        %v989 = vpop.permute.xlu0 %988
        %v991 = vadd.f32 %v981, %v989
        %v992 = vtanh.pop %v991
        %994 = vrot.lane.b32.xlu0 %v992, 64
        %v995 = vpop.permute.xlu0 %994
        %v997 = vmul.f32 %v976, %v995
        %s998 = scalar_lea.vmem %s560, 16 [#allocation4]
        %v999 = vld [vmem:[%s998] sm:$0xff]
        %1000 = vrot.lane.b32.xlu0 %v922, 96
        %v1001 = vpop.permute.xlu0 %1000
        %v1003 = vsub.f32 %v997, %v1001
        %1005 = vset.pattern.permute.xlu0 0
        %1006 = vperm.xlu0 %1005, %v999
        %v1007 = vpop.permute.xlu0 %1006
        %v1009 = vmul.f32 %v1007, %v1003
        %1011 = vrot.lane.b32.xlu0 %v1009, 32
        %v1012 = vpop.permute.xlu0 %1011
        %v1014 = vadd.f32 %v922, %v1012
        %v1015 = vsub.f32 %v991, %v979
        %v1016 = vmul.f32 %v1007, %v1015
        %1018 = vrot.lane.b32.xlu0 %v1016, 96
        %v1019 = vpop.permute.xlu0 %1018
        %v1021 = vadd.f32 %v929, %v1019
        %s1022 = scalar_lea.vmem [#allocation2], 24
        %v1023 = vld [vmem:[%s1022] sm:$0xff]
        %v1025 = vsel %vm663, %v1014, 0
        %1027 = vmatpush.msra.mxu0 0.0
        %1028 = vmatpush.msra.mxu0 0.0
        %1029 = vmatpush.msra.mxu0 0.0
        %1030 = vmatpush.msra.mxu0 0.0
        %1031 = vmatpush.msra.mxu0 0.0
        %1032 = vmatpush.msra.mxu0 0.0
        %1033 = vmatpush.msra.mxu0 0.0
        %1034 = vmatpush.msra.mxu0 0.0
        %1035 = vmatpush.msra.mxu0 0.0
        %1036 = vmatpush.msra.mxu0 0.0
        %1037 = vmatpush.msra.mxu0 0.0
        %1038 = vmatpush.msra.mxu0 0.0
        %1039 = vmatpush.msra.mxu0 %v740
        %1040 = vmatpush.msra.mxu0 %v739
        %1041 = vmatpush.msra.mxu0 %v738
        %1042 = vmatpush.msra.mxu0 %v737
        %1043 = vmatmul.f32.gmra.mxu0 %v1025
        %v1044 = vpop.f32.mrf.mxu0
        %v1045 = vadd.f32 0.0, %v1044
        %1046 = vdwg.mxu0
        %v1047 = vadd.f32 %v1023, %v1045
        %v1048 = vtanh.pop %v1047
        %v1049 = vxor.u32 %v1047, 2147483648
        %v1050 = vmul.f32 %v1049, 1.442695
        %v1051 = vpow.pop %v1050
        %v1052 = vadd.f32 %v1051, 1.0
        %v1053 = vrcp.pop %v1052
        %v1054 = vmul.f32 %v1052, %v1053
        %v1055 = vsub.f32 1.0, %v1054
        %v1056 = vmul.f32 %v1053, %v1055
        %v1057 = vadd.f32 %v1053, %v1056
        %vm1058 = vweird.f32 %v1052
        %vm1059 = vweird.f32 %v1053
        %vm1060 = vmor %vm1058, %vm1059
        %v1061 = vsel %vm1060, %v1053, %v1057
        %v1062 = vand.u32 2147483647, %v1052
        %vm1063 = vcmp.eq.f32.partialorder %v1062, 8.507059e+37
        %v1064 = vand.u32 %v1052, 2147483648
        %v1065 = vor.u32 1.1754944e-38, %v1064
        %v1066 = vsel %vm1063, %v1065, %v1061
        %v1067 = vmul.f32 1.0, %v1066
        %v1068 = vsel %vm745, %v1048, %v1067
        %1070 = vrot.lane.b32.xlu0 %v1021, 32
        %v1071 = vpop.permute.xlu0 %1070
        %v1073 = vmul.f32 %v1068, %v1071
        %1075 = vrot.lane.b32.xlu0 %v1068, 64
        %v1076 = vpop.permute.xlu0 %1075
        %v1078 = vmul.f32 %v1068, %v1076
        %1080 = vrot.lane.b32.xlu0 %v1078, 32
        %v1081 = vpop.permute.xlu0 %1080
        %v1083 = vadd.f32 %v1073, %v1081
        %v1084 = vtanh.pop %v1083
        %1086 = vrot.lane.b32.xlu0 %v1084, 64
        %v1087 = vpop.permute.xlu0 %1086
        %v1089 = vmul.f32 %v1068, %v1087
        %s1090 = scalar_lea.vmem %s560, 24 [#allocation4]
        %v1091 = vld [vmem:[%s1090] sm:$0xff]
        %1092 = vrot.lane.b32.xlu0 %v1014, 96
        %v1093 = vpop.permute.xlu0 %1092
        %v1095 = vsub.f32 %v1089, %v1093
        %1097 = vset.pattern.permute.xlu0 0
        %1098 = vperm.xlu0 %1097, %v1091
        %v1099 = vpop.permute.xlu0 %1098
        %v1101 = vmul.f32 %v1099, %v1095
        %1103 = vrot.lane.b32.xlu0 %v1101, 32
        %v1104 = vpop.permute.xlu0 %1103
        %v1106 = vadd.f32 %v1014, %v1104
        %v1107 = vsub.f32 %v1083, %v1071
        %v1108 = vmul.f32 %v1099, %v1107
        %1110 = vrot.lane.b32.xlu0 %v1108, 96
        %v1111 = vpop.permute.xlu0 %1110
        %v1113 = vadd.f32 %v1021, %v1111
        %s1114 = scalar_lea.vmem [#allocation2], 32
        %v1115 = vld [vmem:[%s1114] sm:$0xff]
        %v1117 = vsel %vm663, %v1106, 0
        %1119 = vmatpush.msra.mxu0 0.0
        %1120 = vmatpush.msra.mxu0 0.0
        %1121 = vmatpush.msra.mxu0 0.0
        %1122 = vmatpush.msra.mxu0 0.0
        %1123 = vmatpush.msra.mxu0 0.0
        %1124 = vmatpush.msra.mxu0 0.0
        %1125 = vmatpush.msra.mxu0 0.0
        %1126 = vmatpush.msra.mxu0 0.0
        %1127 = vmatpush.msra.mxu0 0.0
        %1128 = vmatpush.msra.mxu0 0.0
        %1129 = vmatpush.msra.mxu0 0.0
        %1130 = vmatpush.msra.mxu0 0.0
        %1131 = vmatpush.msra.mxu0 %v740
        %1132 = vmatpush.msra.mxu0 %v739
        %1133 = vmatpush.msra.mxu0 %v738
        %1134 = vmatpush.msra.mxu0 %v737
        %1135 = vmatmul.f32.gmra.mxu0 %v1117
        %v1136 = vpop.f32.mrf.mxu0
        %v1137 = vadd.f32 0.0, %v1136
        %1138 = vdwg.mxu0
        %v1139 = vadd.f32 %v1115, %v1137
        %v1140 = vtanh.pop %v1139
        %v1141 = vxor.u32 %v1139, 2147483648
        %v1142 = vmul.f32 %v1141, 1.442695
        %v1143 = vpow.pop %v1142
        %v1144 = vadd.f32 %v1143, 1.0
        %v1145 = vrcp.pop %v1144
        %v1146 = vmul.f32 %v1144, %v1145
        %v1147 = vsub.f32 1.0, %v1146
        %v1148 = vmul.f32 %v1145, %v1147
        %v1149 = vadd.f32 %v1145, %v1148
        %vm1150 = vweird.f32 %v1144
        %vm1151 = vweird.f32 %v1145
        %vm1152 = vmor %vm1150, %vm1151
        %v1153 = vsel %vm1152, %v1145, %v1149
        %v1154 = vand.u32 2147483647, %v1144
        %vm1155 = vcmp.eq.f32.partialorder %v1154, 8.507059e+37
        %v1156 = vand.u32 %v1144, 2147483648
        %v1157 = vor.u32 1.1754944e-38, %v1156
        %v1158 = vsel %vm1155, %v1157, %v1153
        %v1159 = vmul.f32 1.0, %v1158
        %v1160 = vsel %vm745, %v1140, %v1159
        %1162 = vrot.lane.b32.xlu0 %v1113, 32
        %v1163 = vpop.permute.xlu0 %1162
        %v1165 = vmul.f32 %v1160, %v1163
        %1167 = vrot.lane.b32.xlu0 %v1160, 64
        %v1168 = vpop.permute.xlu0 %1167
        %v1170 = vmul.f32 %v1160, %v1168
        %1172 = vrot.lane.b32.xlu0 %v1170, 32
        %v1173 = vpop.permute.xlu0 %1172
        %v1175 = vadd.f32 %v1165, %v1173
        %v1176 = vtanh.pop %v1175
        %1178 = vrot.lane.b32.xlu0 %v1176, 64
        %v1179 = vpop.permute.xlu0 %1178
        %v1181 = vmul.f32 %v1160, %v1179
        %s1182 = scalar_lea.vmem %s560, 32 [#allocation4]
        %v1183 = vld [vmem:[%s1182] sm:$0xff]
        %1184 = vrot.lane.b32.xlu0 %v1106, 96
        %v1185 = vpop.permute.xlu0 %1184
        %v1187 = vsub.f32 %v1181, %v1185
        %1189 = vset.pattern.permute.xlu0 0
        %1190 = vperm.xlu0 %1189, %v1183
        %v1191 = vpop.permute.xlu0 %1190
        %v1193 = vmul.f32 %v1191, %v1187
        %1195 = vrot.lane.b32.xlu0 %v1193, 32
        %v1196 = vpop.permute.xlu0 %1195
        %v1198 = vadd.f32 %v1106, %v1196
        %v1199 = vsub.f32 %v1175, %v1163
        %v1200 = vmul.f32 %v1191, %v1199
        %1202 = vrot.lane.b32.xlu0 %v1200, 96
        %v1203 = vpop.permute.xlu0 %1202
        %v1205 = vadd.f32 %v1113, %v1203
        %s1206 = scalar_lea.vmem [#allocation2], 40
        %v1207 = vld [vmem:[%s1206] sm:$0xff]
        %v1209 = vsel %vm663, %v1198, 0
        %1211 = vmatpush.msra.mxu0 0.0
        %1212 = vmatpush.msra.mxu0 0.0
        %1213 = vmatpush.msra.mxu0 0.0
        %1214 = vmatpush.msra.mxu0 0.0
        %1215 = vmatpush.msra.mxu0 0.0
        %1216 = vmatpush.msra.mxu0 0.0
        %1217 = vmatpush.msra.mxu0 0.0
        %1218 = vmatpush.msra.mxu0 0.0
        %1219 = vmatpush.msra.mxu0 0.0
        %1220 = vmatpush.msra.mxu0 0.0
        %1221 = vmatpush.msra.mxu0 0.0
        %1222 = vmatpush.msra.mxu0 0.0
        %1223 = vmatpush.msra.mxu0 %v740
        %1224 = vmatpush.msra.mxu0 %v739
        %1225 = vmatpush.msra.mxu0 %v738
        %1226 = vmatpush.msra.mxu0 %v737
        %1227 = vmatmul.f32.gmra.mxu0 %v1209
        %v1228 = vpop.f32.mrf.mxu0
        %v1229 = vadd.f32 0.0, %v1228
        %1230 = vdwg.mxu0
        %v1231 = vadd.f32 %v1207, %v1229
        %v1232 = vtanh.pop %v1231
        %v1233 = vxor.u32 %v1231, 2147483648
        %v1234 = vmul.f32 %v1233, 1.442695
        %v1235 = vpow.pop %v1234
        %v1236 = vadd.f32 %v1235, 1.0
        %v1237 = vrcp.pop %v1236
        %v1238 = vmul.f32 %v1236, %v1237
        %v1239 = vsub.f32 1.0, %v1238
        %v1240 = vmul.f32 %v1237, %v1239
        %v1241 = vadd.f32 %v1237, %v1240
        %vm1242 = vweird.f32 %v1236
        %vm1243 = vweird.f32 %v1237
        %vm1244 = vmor %vm1242, %vm1243
        %v1245 = vsel %vm1244, %v1237, %v1241
        %v1246 = vand.u32 2147483647, %v1236
        %vm1247 = vcmp.eq.f32.partialorder %v1246, 8.507059e+37
        %v1248 = vand.u32 %v1236, 2147483648
        %v1249 = vor.u32 1.1754944e-38, %v1248
        %v1250 = vsel %vm1247, %v1249, %v1245
        %v1251 = vmul.f32 1.0, %v1250
        %v1252 = vsel %vm745, %v1232, %v1251
        %1254 = vrot.lane.b32.xlu0 %v1205, 32
        %v1255 = vpop.permute.xlu0 %1254
        %v1257 = vmul.f32 %v1252, %v1255
        %1259 = vrot.lane.b32.xlu0 %v1252, 64
        %v1260 = vpop.permute.xlu0 %1259
        %v1262 = vmul.f32 %v1252, %v1260
        %1264 = vrot.lane.b32.xlu0 %v1262, 32
        %v1265 = vpop.permute.xlu0 %1264
        %v1267 = vadd.f32 %v1257, %v1265
        %v1268 = vtanh.pop %v1267
        %1270 = vrot.lane.b32.xlu0 %v1268, 64
        %v1271 = vpop.permute.xlu0 %1270
        %v1273 = vmul.f32 %v1252, %v1271
        %s1274 = scalar_lea.vmem %s560, 40 [#allocation4]
        %v1275 = vld [vmem:[%s1274] sm:$0xff]
        %1276 = vrot.lane.b32.xlu0 %v1198, 96
        %v1277 = vpop.permute.xlu0 %1276
        %v1279 = vsub.f32 %v1273, %v1277
        %1281 = vset.pattern.permute.xlu0 0
        %1282 = vperm.xlu0 %1281, %v1275
        %v1283 = vpop.permute.xlu0 %1282
        %v1285 = vmul.f32 %v1283, %v1279
        %1287 = vrot.lane.b32.xlu0 %v1285, 32
        %v1288 = vpop.permute.xlu0 %1287
        %v1290 = vadd.f32 %v1198, %v1288
        %v1291 = vsub.f32 %v1267, %v1255
        %v1292 = vmul.f32 %v1283, %v1291
        %1294 = vrot.lane.b32.xlu0 %v1292, 96
        %v1295 = vpop.permute.xlu0 %1294
        %v1297 = vadd.f32 %v1205, %v1295
        %s1298 = scalar_lea.vmem [#allocation2], 48
        %v1299 = vld [vmem:[%s1298] sm:$0xff]
        %v1301 = vsel %vm663, %v1290, 0
        %1303 = vmatpush.msra.mxu0 0.0
        %1304 = vmatpush.msra.mxu0 0.0
        %1305 = vmatpush.msra.mxu0 0.0
        %1306 = vmatpush.msra.mxu0 0.0
        %1307 = vmatpush.msra.mxu0 0.0
        %1308 = vmatpush.msra.mxu0 0.0
        %1309 = vmatpush.msra.mxu0 0.0
        %1310 = vmatpush.msra.mxu0 0.0
        %1311 = vmatpush.msra.mxu0 0.0
        %1312 = vmatpush.msra.mxu0 0.0
        %1313 = vmatpush.msra.mxu0 0.0
        %1314 = vmatpush.msra.mxu0 0.0
        %1315 = vmatpush.msra.mxu0 %v740
        %1316 = vmatpush.msra.mxu0 %v739
        %1317 = vmatpush.msra.mxu0 %v738
        %1318 = vmatpush.msra.mxu0 %v737
        %1319 = vmatmul.f32.gmra.mxu0 %v1301
        %v1320 = vpop.f32.mrf.mxu0
        %v1321 = vadd.f32 0.0, %v1320
        %1322 = vdwg.mxu0
        %v1323 = vadd.f32 %v1299, %v1321
        %v1324 = vtanh.pop %v1323
        %v1325 = vxor.u32 %v1323, 2147483648
        %v1326 = vmul.f32 %v1325, 1.442695
        %v1327 = vpow.pop %v1326
        %v1328 = vadd.f32 %v1327, 1.0
        %v1329 = vrcp.pop %v1328
        %v1330 = vmul.f32 %v1328, %v1329
        %v1331 = vsub.f32 1.0, %v1330
        %v1332 = vmul.f32 %v1329, %v1331
        %v1333 = vadd.f32 %v1329, %v1332
        %vm1334 = vweird.f32 %v1328
        %vm1335 = vweird.f32 %v1329
        %vm1336 = vmor %vm1334, %vm1335
        %v1337 = vsel %vm1336, %v1329, %v1333
        %v1338 = vand.u32 2147483647, %v1328
        %vm1339 = vcmp.eq.f32.partialorder %v1338, 8.507059e+37
        %v1340 = vand.u32 %v1328, 2147483648
        %v1341 = vor.u32 1.1754944e-38, %v1340
        %v1342 = vsel %vm1339, %v1341, %v1337
        %v1343 = vmul.f32 1.0, %v1342
        %v1344 = vsel %vm745, %v1324, %v1343
        %1346 = vrot.lane.b32.xlu0 %v1297, 32
        %v1347 = vpop.permute.xlu0 %1346
        %v1349 = vmul.f32 %v1344, %v1347
        %1351 = vrot.lane.b32.xlu0 %v1344, 64
        %v1352 = vpop.permute.xlu0 %1351
        %v1354 = vmul.f32 %v1344, %v1352
        %1356 = vrot.lane.b32.xlu0 %v1354, 32
        %v1357 = vpop.permute.xlu0 %1356
        %v1359 = vadd.f32 %v1349, %v1357
        %v1360 = vtanh.pop %v1359
        %1362 = vrot.lane.b32.xlu0 %v1360, 64
        %v1363 = vpop.permute.xlu0 %1362
        %v1365 = vmul.f32 %v1344, %v1363
        %s1366 = scalar_lea.vmem %s560, 48 [#allocation4]
        %v1367 = vld [vmem:[%s1366] sm:$0xff]
        %1368 = vrot.lane.b32.xlu0 %v1290, 96
        %v1369 = vpop.permute.xlu0 %1368
        %v1371 = vsub.f32 %v1365, %v1369
        %1373 = vset.pattern.permute.xlu0 0
        %1374 = vperm.xlu0 %1373, %v1367
        %v1375 = vpop.permute.xlu0 %1374
        %v1377 = vmul.f32 %v1375, %v1371
        %1379 = vrot.lane.b32.xlu0 %v1377, 32
        %v1380 = vpop.permute.xlu0 %1379
        %v1382 = vadd.f32 %v1290, %v1380
        %v1383 = vsub.f32 %v1359, %v1347
        %v1384 = vmul.f32 %v1375, %v1383
        %1386 = vrot.lane.b32.xlu0 %v1384, 96
        %v1387 = vpop.permute.xlu0 %1386
        %v1389 = vadd.f32 %v1297, %v1387
        %s1390 = scalar_lea.vmem [#allocation2], 56
        %v1391 = vld [vmem:[%s1390] sm:$0xff]
        %v1393 = vsel %vm663, %v1382, 0
        %1395 = vmatpush.msra.mxu0 0.0
        %1396 = vmatpush.msra.mxu0 0.0
        %1397 = vmatpush.msra.mxu0 0.0
        %1398 = vmatpush.msra.mxu0 0.0
        %1399 = vmatpush.msra.mxu0 0.0
        %1400 = vmatpush.msra.mxu0 0.0
        %1401 = vmatpush.msra.mxu0 0.0
        %1402 = vmatpush.msra.mxu0 0.0
        %1403 = vmatpush.msra.mxu0 0.0
        %1404 = vmatpush.msra.mxu0 0.0
        %1405 = vmatpush.msra.mxu0 0.0
        %1406 = vmatpush.msra.mxu0 0.0
        %1407 = vmatpush.msra.mxu0 %v740
        %1408 = vmatpush.msra.mxu0 %v739
        %1409 = vmatpush.msra.mxu0 %v738
        %1410 = vmatpush.msra.mxu0 %v737
        %1411 = vmatmul.f32.gmra.mxu0 %v1393
        %v1412 = vpop.f32.mrf.mxu0
        %v1413 = vadd.f32 0.0, %v1412
        %1414 = vdwg.mxu0
        %v1415 = vadd.f32 %v1391, %v1413
        %v1416 = vtanh.pop %v1415
        %v1417 = vxor.u32 %v1415, 2147483648
        %v1418 = vmul.f32 %v1417, 1.442695
        %v1419 = vpow.pop %v1418
        %v1420 = vadd.f32 %v1419, 1.0
        %v1421 = vrcp.pop %v1420
        %v1422 = vmul.f32 %v1420, %v1421
        %v1423 = vsub.f32 1.0, %v1422
        %v1424 = vmul.f32 %v1421, %v1423
        %v1425 = vadd.f32 %v1421, %v1424
        %vm1426 = vweird.f32 %v1420
        %vm1427 = vweird.f32 %v1421
        %vm1428 = vmor %vm1426, %vm1427
        %v1429 = vsel %vm1428, %v1421, %v1425
        %v1430 = vand.u32 2147483647, %v1420
        %vm1431 = vcmp.eq.f32.partialorder %v1430, 8.507059e+37
        %v1432 = vand.u32 %v1420, 2147483648
        %v1433 = vor.u32 1.1754944e-38, %v1432
        %v1434 = vsel %vm1431, %v1433, %v1429
        %v1435 = vmul.f32 1.0, %v1434
        %v1436 = vsel %vm745, %v1416, %v1435
        %1438 = vrot.lane.b32.xlu0 %v1389, 32
        %v1439 = vpop.permute.xlu0 %1438
        %v1441 = vmul.f32 %v1436, %v1439
        %1443 = vrot.lane.b32.xlu0 %v1436, 64
        %v1444 = vpop.permute.xlu0 %1443
        %v1446 = vmul.f32 %v1436, %v1444
        %1448 = vrot.lane.b32.xlu0 %v1446, 32
        %v1449 = vpop.permute.xlu0 %1448
        %v1451 = vadd.f32 %v1441, %v1449
        %v1452 = vtanh.pop %v1451
        %1454 = vrot.lane.b32.xlu0 %v1452, 64
        %v1455 = vpop.permute.xlu0 %1454
        %v1457 = vmul.f32 %v1436, %v1455
        %s1458 = scalar_lea.vmem %s560, 56 [#allocation4]
        %v1459 = vld [vmem:[%s1458] sm:$0xff]
        %1460 = vrot.lane.b32.xlu0 %v1382, 96
        %v1461 = vpop.permute.xlu0 %1460
        %v1463 = vsub.f32 %v1457, %v1461
        %1465 = vset.pattern.permute.xlu0 0
        %1466 = vperm.xlu0 %1465, %v1459
        %v1467 = vpop.permute.xlu0 %1466
        %v1469 = vmul.f32 %v1467, %v1463
        %1471 = vrot.lane.b32.xlu0 %v1469, 32
        %v1472 = vpop.permute.xlu0 %1471
        %v1474 = vadd.f32 %v1382, %v1472
        %v1475 = vld [vmem:[#allocation7] sm:$0xff]
        %v1476 = vld [vmem:[#allocation7 + $0x8] sm:$0xff]
        %v1477 = vld [vmem:[#allocation7 + $0x10] sm:$0xff]
        %v1478 = vld [vmem:[#allocation7 + $0x18] sm:$0xff]
        %v1479 = vld [vmem:[#allocation9] sm:$0x1]
        %v1481 = vperm.slane %v1479, 0
        %v1484 = vsel %vm663, %v1474, 0
        %1486 = vmatpush.msra.mxu0 0.0
        %1487 = vmatpush.msra.mxu0 0.0
        %1488 = vmatpush.msra.mxu0 0.0
        %1489 = vmatpush.msra.mxu0 0.0
        %1490 = vmatpush.msra.mxu0 0.0
        %1491 = vmatpush.msra.mxu0 0.0
        %1492 = vmatpush.msra.mxu0 0.0
        %1493 = vmatpush.msra.mxu0 0.0
        %1494 = vmatpush.msra.mxu0 0.0
        %1495 = vmatpush.msra.mxu0 0.0
        %1496 = vmatpush.msra.mxu0 0.0
        %1497 = vmatpush.msra.mxu0 0.0
        %1498 = vmatpush.msra.mxu0 %v1478
        %1499 = vmatpush.msra.mxu0 %v1477
        %1500 = vmatpush.msra.mxu0 %v1476
        %1501 = vmatpush.msra.mxu0 %v1475
        %1502 = vmatmul.f32.gmra.mxu0 %v1484
        %v1503 = vpop.f32.mrf.mxu0
        %v1504 = vadd.f32 %v1481, %v1503
        %1505 = vdwg.mxu0
        %v1506 = vtanh.pop %v1504
        %v1507 = vld [vmem:[%s7] sm:$0xff]
        %v1508 = vld [vmem:[%s7 + $0x8] sm:$0xff]
        %v1509 = vld [vmem:[%s7 + $0x10] sm:$0xff]
        %v1510 = vld [vmem:[%s7 + $0x18] sm:$0xff]
        %v1511 = vld [vmem:[#allocation10] sm:$0x1]
        %v1513 = vperm.slane %v1511, 0
        %v1516 = vsel %vm663, %v1506, 0
        %1518 = vmatpush.msra.mxu0 0.0
        %1519 = vmatpush.msra.mxu0 0.0
        %1520 = vmatpush.msra.mxu0 0.0
        %1521 = vmatpush.msra.mxu0 0.0
        %1522 = vmatpush.msra.mxu0 0.0
        %1523 = vmatpush.msra.mxu0 0.0
        %1524 = vmatpush.msra.mxu0 0.0
        %1525 = vmatpush.msra.mxu0 0.0
        %1526 = vmatpush.msra.mxu0 0.0
        %1527 = vmatpush.msra.mxu0 0.0
        %1528 = vmatpush.msra.mxu0 0.0
        %1529 = vmatpush.msra.mxu0 0.0
        %1530 = vmatpush.msra.mxu0 %v1510
        %1531 = vmatpush.msra.mxu0 %v1509
        %1532 = vmatpush.msra.mxu0 %v1508
        %1533 = vmatpush.msra.mxu0 %v1507
        %1534 = vmatmul.f32.gmra.mxu0 %v1516
        %v1535 = vpop.f32.mrf.mxu0
        %v1536 = vadd.f32 %v1513, %v1535
        %1537 = vdwg.mxu0
        %vm1538 = vcmask 64512
        %1539 = vst.msk [vmem:[%s646] sm:$0xff] %vm1538, %v1536
        %p1540 = scmp.lt.s32.totalorder %s25, 1
        %s1541 = scalar_select %p1540, %s25, 1
        %s1542 = smul.addr %s1541, 8
        %s1543 = scalar_lea.vmem %s11, %s1542
        // Predicated region
        $region161: #{tpu_custom_call.1} parent=131 // pred_check
          %p1544 = pneg %p294
        $region162: #{tpu_custom_call.1} parent=131 // pred_check_branch
          %1546 = sbr.rel (%p1544) target = $region164
        $region163: #{tpu_custom_call.1} parent=131 // pred_region
          _
        $region164: #{tpu_custom_call.1} parent=131 // pred_fallthru
          _
      $region132: #{tpu_custom_call.1} parent=5 // pred_fallthru
        _
      %p1547 = scmp.le.s32.totalorder 2, %s20
      // Predicated region
      $region165: #{tpu_custom_call.1} parent=5 // pred_check
        %p1548 = pneg %p1547
      $region166: #{tpu_custom_call.1} parent=5 // pred_check_branch
        %1550 = sbr.rel (%p1548) target = $region168
      $region167: #{tpu_custom_call.1} parent=5 // pred_region
        %s1551 = ssub.s32 %s20, 2
        // Predicated region
        $region169: #{tpu_custom_call.1} parent=167 // pred_check
          %p1552 = pneg %p300
        $region170: #{tpu_custom_call.1} parent=167 // pred_check_branch
          %1554 = sbr.rel (%p1552) target = $region172
        $region171: #{tpu_custom_call.1} parent=167 // pred_region
          %p1555 = scmp.lt.s32.totalorder %s26, 1
          %s1556 = scalar_select %p1555, %s26, 1
          %s1557 = smul.addr %s1556, 8
          %s1558 = scalar_lea.vmem %s11, %s1557
        $region172: #{tpu_custom_call.1} parent=167 // pred_fallthru
          _
      $region168: #{tpu_custom_call.1} parent=5 // pred_fallthru
        _
    $region6: #{tpu_custom_call.1} parent=1 // loop_footer
      %s24 = sadd.s32 1, %s20
    $region7: #{tpu_custom_call.1} parent=1 // loop_footer_branch
      %19 = sbr.rel target = $region3
    $region8: #{tpu_custom_call.1} parent=1 // loop_exit
      _
    %1559 = vsyncpa [#allocation6], 1
    %s1560 = scalar_lea.sflag [#allocation6], 1
    %1561 = vsyncpa %s1560, 1
    %1562 = vsyncpa [#allocation8], 1
    %1563 = vsyncpa [#allocation11], 1

</llo_original>
